<compile_context>
chip_gen: v6e
topology: v6e:2x2x1
jax: 0.10.0
libtpu: 0.0.40
codegen_flags: <defaults>
</compile_context>

<pallas_src>
import functools

import jax
import jax.numpy as jnp
import numpy as np
from jax import lax
from jax.experimental import pallas as pl
from jax.experimental.pallas import tpu as pltpu

EPS = 1e-5
MXU_DTYPE = jnp.bfloat16          # MXU operand dtype (accumulation stays f32)


def _compiler_params():
    return pltpu.CompilerParams(
        dimension_semantics=("parallel",),
        vmem_limit_bytes=32 * 1024 * 1024,
    )


# ---------------------------------------------------------------------------
# BlockSpec helpers
# ---------------------------------------------------------------------------
def _img_spec(shape):
    """Batch dim tiled by 1, remaining dims whole (lane dim = H*W, dense)."""
    nd = len(shape)
    block = (1,) + tuple(int(s) for s in shape[1:])
    return pl.BlockSpec(block, lambda n, _nd=nd: (n,) + (0,) * (_nd - 1))


def _rep_spec(shape):
    """Whole array as one block, re-used across all grid steps (weights)."""
    nd = len(shape)
    return pl.BlockSpec(tuple(int(s) for s in shape),
                        lambda n, _nd=nd: (0,) * _nd)


# ---------------------------------------------------------------------------
# In-kernel helpers (channels on sublanes, flattened H*W on lanes)
# ---------------------------------------------------------------------------
def _pad_sizes(W):
    # Front pad is >= W+1 zeros and a multiple of 128 so the interior store
    # stays lane-aligned; back pad is W+1 zeros.
    front = ((W + 1 + 127) // 128) * 128
    return front, W + 1


def _fill_flat_pad(apad_ref, a, W):
    """apad <- [0 .. 0 | a | 0 .. 0] along the flattened-spatial lane dim."""
    front, _ = _pad_sizes(W)
    C, HW = a.shape
    apad_ref[...] = jnp.zeros_like(apad_ref)        # zero halo (every step)
    apad_ref[0:C, front:front + HW] = a


def _tap(apad_ref, xpos, H, W, dy, dx):
    """tap[c, y*W + x] = a[c, (y+dy)*W + (x+dx)], zero outside the HxW image.

    The y out-of-range cases fall into the zero halo of `apad_ref`; the
    row-wrap of the flattened layout in x is masked with a per-lane select.
    """
    front, _ = _pad_sizes(W)
    HW = H * W
    start = front + dy * W + dx
    t = apad_ref[:, start:start + HW]
    if dx != 0:
        ok = (xpos + dx >= 0) & (xpos + dx < W)
        t = jnp.where(ok, t, 0.0)
    return t


def _store_out_and_stats(out_ref, stats_ref, y):
    """Store the pre-BN activation (lane-dense) + packed [sum; sumsq] stats."""
    M = out_ref.shape[1]
    out_ref[0] = y
    stats_ref[0, 0:M, :] = jnp.sum(y, axis=1, keepdims=True)
    stats_ref[0, M:2 * M, :] = jnp.sum(y * y, axis=1, keepdims=True)


# ---------------------------------------------------------------------------
# Pallas kernels
# ---------------------------------------------------------------------------
def _sep_body(x_ref, scale_ref, shift_ref, w_ref, out_ref, stats_ref, apad_ref,
              *, H, W):
    """SeparableConv2d(3x3, pad 1) as ONE matmul (depthwise folded into the
    pointwise on the host, K = 9*C), with the previous stage's BN+ReLU applied
    on the fly (skipped for conv1) and BN partial stats emitted."""
    HW = H * W
    a = x_ref[0]                                     # (C, H*W) f32
    if scale_ref is not None:
        a = jnp.maximum(a * scale_ref[...] + shift_ref[...], 0.0)
    _fill_flat_pad(apad_ref, a, W)
    xpos = lax.broadcasted_iota(jnp.int32, (1, HW), 1) % W
    pieces = []
    for t in range(9):                               # tap order t = kh*3 + kw
        dy, dx = t // 3 - 1, t % 3 - 1
        pieces.append(_tap(apad_ref, xpos, H, W, dy, dx).astype(MXU_DTYPE))
    lhs = jnp.concatenate(pieces, axis=0)            # (9*C, H*W) bf16
    y = jnp.dot(w_ref[...], lhs, preferred_element_type=jnp.float32)  # (M, HW)
    _store_out_and_stats(out_ref, stats_ref, y)


def _sep_kernel(x_ref, w_ref, out_ref, stats_ref, apad_ref, *, H, W):
    _sep_body(x_ref, None, None, w_ref, out_ref, stats_ref, apad_ref, H=H, W=W)


def _sep_act_kernel(x_ref, scale_ref, shift_ref, w_ref, out_ref, stats_ref,
                    apad_ref, *, H, W):
    _sep_body(x_ref, scale_ref, shift_ref, w_ref, out_ref, stats_ref, apad_ref,
              H=H, W=W)


def _deconv_kernel(y_ref, scale_ref, shift_ref, w_ref, out_ref, stats_ref,
                   apad_ref, *, H, W):
    """ConvTranspose2d(3, s=2, p=1, op=1) as ONE sub-pixel matmul with BN1+ReLU1
    fused on the input.  Output is phase-packed: rows = (py*2+px)*C + c."""
    HW = H * W
    a = jnp.maximum(y_ref[0] * scale_ref[...] + shift_ref[...], 0.0)
    _fill_flat_pad(apad_ref, a, W)
    xpos = lax.broadcasted_iota(jnp.int32, (1, HW), 1) % W
    # 4 shifted input slabs (dy, dx in {0,1}), each padded to 8 sublanes so the
    # concatenation (K axis of the single matmul) stays tile-aligned.
    pieces = [_tap(apad_ref, xpos, H, W, dy, dx)
              for dy in (0, 1) for dx in (0, 1)]
    lhs = jnp.concatenate(pieces, axis=0).astype(MXU_DTYPE)   # (4*Cpad, H*W)
    y = jnp.dot(w_ref[...], lhs, preferred_element_type=jnp.float32)
    _store_out_and_stats(out_ref, stats_ref, y)


# ---------------------------------------------------------------------------
# pallas_call wrappers (grid over batch, pipelined + megacore-parallel)
# ---------------------------------------------------------------------------
def _sep_call(x, w, H, W, scale=None, shift=None):
    N, C, HW = x.shape
    M = w.shape[0]
    front, back = _pad_sizes(W)
    if scale is None:
        kernel = functools.partial(_sep_kernel, H=H, W=W)
        args = (x, w)
        in_specs = [_img_spec(x.shape), _rep_spec(w.shape)]
    else:
        kernel = functools.partial(_sep_act_kernel, H=H, W=W)
        args = (x, scale, shift, w)
        in_specs = [_img_spec(x.shape), _rep_spec(scale.shape),
                    _rep_spec(shift.shape), _rep_spec(w.shape)]
    out_shape = (jax.ShapeDtypeStruct((N, M, HW), jnp.float32),
                 jax.ShapeDtypeStruct((N, 2 * M, 1), jnp.float32))
    out_specs = (_img_spec((N, M, HW)), _img_spec((N, 2 * M, 1)))
    return pl.pallas_call(
        kernel,
        out_shape=out_shape,
        grid=(N,),
        in_specs=in_specs,
        out_specs=out_specs,
        scratch_shapes=[pltpu.VMEM((C, front + HW + back), jnp.float32)],
        compiler_params=_compiler_params(),
    )(*args)


def _deconv_call(y1, scale1, shift1, wdec, H, W):
    N, C, HW = y1.shape
    M = wdec.shape[0]                    # 4 * C
    Cpad = wdec.shape[1] // 4            # C rounded up to the sublane tile
    front, back = _pad_sizes(W)
    out_shape = (jax.ShapeDtypeStruct((N, M, HW), jnp.float32),
                 jax.ShapeDtypeStruct((N, 2 * M, 1), jnp.float32))
    return pl.pallas_call(
        functools.partial(_deconv_kernel, H=H, W=W),
        out_shape=out_shape,
        grid=(N,),
        in_specs=[_img_spec(y1.shape), _rep_spec(scale1.shape),
                  _rep_spec(shift1.shape), _rep_spec(wdec.shape)],
        out_specs=(_img_spec((N, M, HW)), _img_spec((N, 2 * M, 1))),
        scratch_shapes=[pltpu.VMEM((Cpad, front + HW + back), jnp.float32)],
        compiler_params=_compiler_params(),
    )(y1, scale1, shift1, wdec)


# ---------------------------------------------------------------------------
# BatchNorm finalize: combine per-image partial stats -> global affine (f32)
# ---------------------------------------------------------------------------
def _bn_affine(stats, count, gamma, beta, n_phases=1):
    """stats: (N, 2*R, 1) with R = n_phases*C, rows [0:R]=sum, [R:2R]=sumsq."""
    N, two_r, _ = stats.shape
    R = two_r // 2
    C = R // n_phases
    s = jnp.sum(stats[:, :R, 0].reshape(N * n_phases, C), axis=0)
    q = jnp.sum(stats[:, R:, 0].reshape(N * n_phases, C), axis=0)
    mean = s / count
    var = q / count - mean * mean          # biased variance (PyTorch training BN)
    inv = lax.rsqrt(var + EPS)
    scale = gamma * inv
    shift = beta - mean * scale
    return scale.astype(jnp.float32), shift.astype(jnp.float32)


# ---------------------------------------------------------------------------
# Host-side weight re-layout (PyTorch-shape-faithful inputs)
# ---------------------------------------------------------------------------
def _combine_sepconv(wdw, wpw):
    """Depthwise (C,1,3,3) + pointwise (M,C,1,1)  ->  (M, 9*C) matmul weight
    with Wc[co, t*C+ci] = wdw[ci,0,kh,kw]*wpw[co,ci],  t = kh*3+kw."""
    wdw = np.asarray(wdw, np.float32)
    wpw = np.asarray(wpw, np.float32)
    C, M = wdw.shape[0], wpw.shape[0]
    dw = wdw[:, 0].reshape(C, 9).T                 # (9, C)
    pw = wpw[:, :, 0, 0]                           # (M, C)
    w = pw[:, None, :] * dw[None, :, :]            # (M, 9, C)
    return jnp.asarray(w.reshape(M, 9 * C), MXU_DTYPE)


def _pack_deconv(wt):
    """ConvTranspose2d weight (Cin,Cout,3,3) -> sub-pixel matmul weight
    (4*Cout, 4*Cpad):  W[(py*2+px)*Cout+co, (dy*2+dx)*Cpad+ci] =
    wt[ci,co, py+1-2dy, px+1-2dx]  (zero when the kernel index is out of range;
    columns ci >= Cin are zero pad so the 4 input slabs stay sublane-aligned)."""
    wt = np.asarray(wt, np.float32)
    Cin, Cout = wt.shape[:2]
    Cpad = ((Cin + 7) // 8) * 8
    w = np.zeros((4 * Cout, 4 * Cpad), np.float32)
    for py in range(2):
        for px in range(2):
            for dy in range(2):
                for dx in range(2):
                    kh, kw = py + 1 - 2 * dy, px + 1 - 2 * dx
                    if 0 <= kh < 3 and 0 <= kw < 3:
                        r0 = (py * 2 + px) * Cout
                        c0 = (dy * 2 + dx) * Cpad
                        w[r0:r0 + Cout, c0:c0 + Cin] = wt[:, :, kh, kw].T
    return jnp.asarray(w, MXU_DTYPE)


def _pack_conv3(wdw, wpw):
    """conv3 separable weights folded for DIRECT consumption of the 4-phase
    packed deconv output:
      W3[(py*2+px)*M+co, s*4C + (qy*2+qx)*C + ci] = wdw[ci,0,kh,kw]*wpw[co,ci]
    with s=(sy+1)*3+(sx+1), kh=2*sy+qy+1-py, kw=2*sx+qx+1-px (0 if invalid)."""
    wdw = np.asarray(wdw, np.float32)
    wpw = np.asarray(wpw, np.float32)
    C, M = wdw.shape[0], wpw.shape[0]
    pw = wpw[:, :, 0, 0]                           # (M, C)
    w = np.zeros((4 * M, 9 * 4 * C), np.float32)
    for py in range(2):
        for px in range(2):
            r0 = (py * 2 + px) * M
            for sy in (-1, 0, 1):
                for sx in (-1, 0, 1):
                    s = (sy + 1) * 3 + (sx + 1)
                    for qy in range(2):
                        for qx in range(2):
                            kh = 2 * sy + qy + 1 - py
                            kw = 2 * sx + qx + 1 - px
                            if 0 <= kh < 3 and 0 <= kw < 3:
                                c0 = s * 4 * C + (qy * 2 + qx) * C
                                w[r0:r0 + M, c0:c0 + C] = (
                                    pw * wdw[:, 0, kh, kw][None, :])
    return jnp.asarray(w, MXU_DTYPE)


def make_params(key, in_channels, n_filters):
    C4 = in_channels // 4
    ks = jax.random.split(key, 6)
    wdw1 = jax.random.normal(ks[0], (in_channels, 1, 3, 3), jnp.float32) * 0.1
    wpw1 = jax.random.normal(ks[1], (C4, in_channels, 1, 1), jnp.float32) * 0.1
    wt2 = jax.random.normal(ks[2], (C4, C4, 3, 3), jnp.float32) * 0.1
    wdw3 = jax.random.normal(ks[4], (C4, 1, 3, 3), jnp.float32) * 0.1
    wpw3 = jax.random.normal(ks[5], (n_filters, C4, 1, 1), jnp.float32) * 0.1
    # NOTE: the ConvTranspose2d bias is exactly cancelled by the training-mode
    # BatchNorm mean subtraction that follows, so it is omitted (dead work).
    return dict(
        wc1=_combine_sepconv(wdw1, wpw1),          # (C4, 9*Cin)
        wdec=_pack_deconv(wt2),                    # (4*C4, 4*Cpad)
        wc3=_pack_conv3(wdw3, wpw3),               # (4*nf, 9*4*C4)
        g1=jnp.ones((C4,), jnp.float32), b1=jnp.zeros((C4,), jnp.float32),
        g2=jnp.ones((C4,), jnp.float32), b2=jnp.zeros((C4,), jnp.float32),
        g3=jnp.ones((n_filters,), jnp.float32),
        b3=jnp.zeros((n_filters,), jnp.float32),
    )


# ---------------------------------------------------------------------------
# Forward pass
# ---------------------------------------------------------------------------
@jax.jit
def decoder_block_forward(x_nchw, params):
    N, Cin, H, W = x_nchw.shape
    C4 = Cin // 4
    nf = params["g3"].shape[0]
    HW = H * W

    # NCHW -> (N, C, H*W): a free reshape (no transpose needed in this layout).
    x = x_nchw.astype(jnp.float32).reshape(N, Cin, HW)

    # --- conv1 (separable 3x3, single matmul) + BN1 partial stats -----------
    y1, st1 = _sep_call(x, params["wc1"], H, W)
    scale1, shift1 = _bn_affine(st1, N * HW, params["g1"], params["b1"])

    # --- deconv2 (sub-pixel ConvTranspose, single matmul, BN1+ReLU1 fused) --
    y2p, st2 = _deconv_call(y1, scale1.reshape(C4, 1), shift1.reshape(C4, 1),
                            params["wdec"], H, W)              # (N, 4*C4, HW)
    scale2, shift2 = _bn_affine(st2, N * 4 * HW, params["g2"], params["b2"],
                                n_phases=4)

    # --- conv3 (separable 3x3 on the packed phases, BN2+ReLU2 fused) --------
    s2p = jnp.tile(scale2, 4).reshape(4 * C4, 1)   # phase-replicated affine
    h2p = jnp.tile(shift2, 4).reshape(4 * C4, 1)
    z, st3 = _sep_call(y2p, params["wc3"], H, W, scale=s2p, shift=h2p)
    scale3, shift3 = _bn_affine(st3, N * 4 * HW, params["g3"], params["b3"],
                                n_phases=4)

    # --- norm3 + relu3 + sub-pixel unpack to NCHW (tiny, one fused XLA op) --
    zp = z.reshape(N, 2, 2, nf, H, W)                        # (n,py,px,c,y,x)
    zp = jnp.maximum(zp * scale3.reshape(1, 1, 1, nf, 1, 1)
                     + shift3.reshape(1, 1, 1, nf, 1, 1), 0.0)
    out = zp.transpose(0, 3, 4, 1, 5, 2).reshape(N, nf, 2 * H, 2 * W)
    return out


# ---------------------------------------------------------------------------
if __name__ == "__main__":
    in_channels, n_filters = 16, 8
    N, H, W = 2, 16, 16

    key = jax.random.PRNGKey(0)
    k_x, k_p = jax.random.split(key)
    x = jax.random.normal(k_x, (N, in_channels, H, W), jnp.float32)   # NCHW
    params = make_params(k_p, in_channels, n_filters)

    out = decoder_block_forward(x, params)
    out = jax.block_until_ready(out)

    assert out.shape == (N, n_filters, 2 * H, 2 * W), out.shape
    assert bool(jnp.all(jnp.isfinite(out)))
    assert bool(jnp.all(out >= 0.0))  # final ReLU

    print("KERNEL_OK")
</pallas_src>

<mosaic_0001>
module attributes {stable_mosaic.version = 11 : i64} {
  func.func @_sep_kernel(%arg0: i32, %arg1: memref<1x16x256xf32, #tpu.memory_space<vmem>>, %arg2: memref<4x144xbf16, #tpu.memory_space<vmem>>, %arg3: memref<1x4x256xf32, #tpu.memory_space<vmem>>, %arg4: memref<1x8x1xf32, #tpu.memory_space<vmem>>, %arg5: memref<16x401xf32, #tpu.memory_space<vmem>>) attributes {dimension_semantics = [#tpu.dimension_semantics<parallel>], iteration_bounds = array<i64: 2>, scalar_prefetch = 0 : i64, scratch_operands = 1 : i64, tpu.core_type = #tpu.core_type<tc>, window_params = [{transform_indices = @transform_0, window_bounds = array<i64: 1, 16, 256>}, {pipeline_mode = #tpu.pipeline_mode<synchronous>, transform_indices = @transform_1, window_bounds = array<i64: 4, 144>}, {transform_indices = @transform_2, window_bounds = array<i64: 1, 4, 256>}, {transform_indices = @transform_3, window_bounds = array<i64: 1, 8, 1>}]} {
    %c0 = arith.constant 0 : index
    %c0_0 = arith.constant 0 : index
    %c0_1 = arith.constant 0 : index
    %0 = vector.load %arg1[%c0, %c0_0, %c0_1] : memref<1x16x256xf32, #tpu.memory_space<vmem>>, vector<1x16x256xf32>
    %1 = vector.shape_cast %0 : vector<1x16x256xf32> to vector<16x256xf32>
    %cst = arith.constant 0.000000e+00 : f32
    %2 = vector.broadcast %cst : f32 to vector<16x401xf32>
    %c0_2 = arith.constant 0 : index
    %c0_3 = arith.constant 0 : index
    %3 = vector.load %arg5[%c0_2, %c0_3] : memref<16x401xf32, #tpu.memory_space<vmem>>, vector<16x401xf32>
    tpu.vector_store %arg5[%c0_2, %c0_3], %2 {strides = array<i32>} : memref<16x401xf32, #tpu.memory_space<vmem>>, vector<16x401xf32>,
    %c0_4 = arith.constant 0 : index
    %c128 = arith.constant 128 : index
    %4 = vector.load %arg5[%c0_4, %c128] : memref<16x401xf32, #tpu.memory_space<vmem>>, vector<16x256xf32>
    tpu.vector_store %arg5[%c0_4, %c128], %1 {strides = array<i32>} : memref<16x401xf32, #tpu.memory_space<vmem>>, vector<16x256xf32>,
    %5 = tpu.iota {dimensions = array<i32: 1>} : vector<1x256xi32>
    %c16_i32 = arith.constant 16 : i32
    %c0_i32 = arith.constant 0 : i32
    %6 = arith.cmpi eq, %c16_i32, %c0_i32 : i32
    %c1_i32 = arith.constant 1 : i32
    %7 = arith.select %6, %c1_i32, %c16_i32 : i32
    %8 = vector.broadcast %7 : i32 to vector<1x256xi32>
    %9 = arith.remsi %5, %8 : vector<1x256xi32>
    %c0_i32_5 = arith.constant 0 : i32
    %10 = vector.broadcast %c0_i32_5 : i32 to vector<1x256xi32>
    %11 = arith.cmpi ne, %9, %10 : vector<1x256xi32>
    %c0_i32_6 = arith.constant 0 : i32
    %12 = vector.broadcast %c0_i32_6 : i32 to vector<1x256xi32>
    %13 = arith.cmpi slt, %9, %12 : vector<1x256xi32>
    %c0_i32_7 = arith.constant 0 : i32
    %14 = arith.cmpi slt, %7, %c0_i32_7 : i32
    %15 = vector.broadcast %14 : i1 to vector<1x256xi1>
    %16 = vector.broadcast %15 : vector<1x256xi1> to vector<1x256xi1>
    %17 = arith.xori %13, %16 : vector<1x256xi1>
    %18 = arith.andi %17, %11 : vector<1x256xi1>
    %19 = vector.broadcast %7 : i32 to vector<1x256xi32>
    %20 = arith.addi %9, %19 : vector<1x256xi32>
    %21 = arith.select %18, %20, %9 : vector<1x256xi1>, vector<1x256xi32>
    %c0_8 = arith.constant 0 : index
    %c111 = arith.constant 111 : index
    %22 = vector.load %arg5[%c0_8, %c111] : memref<16x401xf32, #tpu.memory_space<vmem>>, vector<16x256xf32>
    %c-1_i32 = arith.constant -1 : i32
    %23 = vector.broadcast %c-1_i32 : i32 to vector<1x256xi32>
    %24 = arith.addi %21, %23 : vector<1x256xi32>
    %c0_i32_9 = arith.constant 0 : i32
    %25 = vector.broadcast %c0_i32_9 : i32 to vector<1x256xi32>
    %26 = arith.cmpi sge, %24, %25 : vector<1x256xi32>
    %c-1_i32_10 = arith.constant -1 : i32
    %27 = vector.broadcast %c-1_i32_10 : i32 to vector<1x256xi32>
    %28 = arith.addi %21, %27 : vector<1x256xi32>
    %c16_i32_11 = arith.constant 16 : i32
    %29 = vector.broadcast %c16_i32_11 : i32 to vector<1x256xi32>
    %30 = arith.cmpi slt, %28, %29 : vector<1x256xi32>
    %31 = arith.andi %26, %30 : vector<1x256xi1>
    %cst_12 = arith.constant 0.000000e+00 : f32
    %32 = vector.shape_cast %31 : vector<1x256xi1> to vector<1x256xi1>
    %33 = vector.broadcast %32 : vector<1x256xi1> to vector<16x256xi1>
    %34 = vector.broadcast %cst_12 : f32 to vector<16x256xf32>
    %35 = arith.select %33, %22, %34 : vector<16x256xi1>, vector<16x256xf32>
    %36 = arith.truncf %35 : vector<16x256xf32> to vector<16x256xbf16>
    %c0_13 = arith.constant 0 : index
    %c112 = arith.constant 112 : index
    %37 = vector.load %arg5[%c0_13, %c112] : memref<16x401xf32, #tpu.memory_space<vmem>>, vector<16x256xf32>
    %38 = arith.truncf %37 : vector<16x256xf32> to vector<16x256xbf16>
    %c0_14 = arith.constant 0 : index
    %c113 = arith.constant 113 : index
    %39 = vector.load %arg5[%c0_14, %c113] : memref<16x401xf32, #tpu.memory_space<vmem>>, vector<16x256xf32>
    %c1_i32_15 = arith.constant 1 : i32
    %40 = vector.broadcast %c1_i32_15 : i32 to vector<1x256xi32>
    %41 = arith.addi %21, %40 : vector<1x256xi32>
    %c0_i32_16 = arith.constant 0 : i32
    %42 = vector.broadcast %c0_i32_16 : i32 to vector<1x256xi32>
    %43 = arith.cmpi sge, %41, %42 : vector<1x256xi32>
    %c1_i32_17 = arith.constant 1 : i32
    %44 = vector.broadcast %c1_i32_17 : i32 to vector<1x256xi32>
    %45 = arith.addi %21, %44 : vector<1x256xi32>
    %c16_i32_18 = arith.constant 16 : i32
    %46 = vector.broadcast %c16_i32_18 : i32 to vector<1x256xi32>
    %47 = arith.cmpi slt, %45, %46 : vector<1x256xi32>
    %48 = arith.andi %43, %47 : vector<1x256xi1>
    %cst_19 = arith.constant 0.000000e+00 : f32
    %49 = vector.shape_cast %48 : vector<1x256xi1> to vector<1x256xi1>
    %50 = vector.broadcast %49 : vector<1x256xi1> to vector<16x256xi1>
    %51 = vector.broadcast %cst_19 : f32 to vector<16x256xf32>
    %52 = arith.select %50, %39, %51 : vector<16x256xi1>, vector<16x256xf32>
    %53 = arith.truncf %52 : vector<16x256xf32> to vector<16x256xbf16>
    %c0_20 = arith.constant 0 : index
    %c127 = arith.constant 127 : index
    %54 = vector.load %arg5[%c0_20, %c127] : memref<16x401xf32, #tpu.memory_space<vmem>>, vector<16x256xf32>
    %c-1_i32_21 = arith.constant -1 : i32
    %55 = vector.broadcast %c-1_i32_21 : i32 to vector<1x256xi32>
    %56 = arith.addi %21, %55 : vector<1x256xi32>
    %c0_i32_22 = arith.constant 0 : i32
    %57 = vector.broadcast %c0_i32_22 : i32 to vector<1x256xi32>
    %58 = arith.cmpi sge, %56, %57 : vector<1x256xi32>
    %c-1_i32_23 = arith.constant -1 : i32
    %59 = vector.broadcast %c-1_i32_23 : i32 to vector<1x256xi32>
    %60 = arith.addi %21, %59 : vector<1x256xi32>
    %c16_i32_24 = arith.constant 16 : i32
    %61 = vector.broadcast %c16_i32_24 : i32 to vector<1x256xi32>
    %62 = arith.cmpi slt, %60, %61 : vector<1x256xi32>
    %63 = arith.andi %58, %62 : vector<1x256xi1>
    %cst_25 = arith.constant 0.000000e+00 : f32
    %64 = vector.shape_cast %63 : vector<1x256xi1> to vector<1x256xi1>
    %65 = vector.broadcast %64 : vector<1x256xi1> to vector<16x256xi1>
    %66 = vector.broadcast %cst_25 : f32 to vector<16x256xf32>
    %67 = arith.select %65, %54, %66 : vector<16x256xi1>, vector<16x256xf32>
    %68 = arith.truncf %67 : vector<16x256xf32> to vector<16x256xbf16>
    %c0_26 = arith.constant 0 : index
    %c128_27 = arith.constant 128 : index
    %69 = vector.load %arg5[%c0_26, %c128_27] : memref<16x401xf32, #tpu.memory_space<vmem>>, vector<16x256xf32>
    %70 = arith.truncf %69 : vector<16x256xf32> to vector<16x256xbf16>
    %c0_28 = arith.constant 0 : index
    %c129 = arith.constant 129 : index
    %71 = vector.load %arg5[%c0_28, %c129] : memref<16x401xf32, #tpu.memory_space<vmem>>, vector<16x256xf32>
    %c1_i32_29 = arith.constant 1 : i32
    %72 = vector.broadcast %c1_i32_29 : i32 to vector<1x256xi32>
    %73 = arith.addi %21, %72 : vector<1x256xi32>
    %c0_i32_30 = arith.constant 0 : i32
    %74 = vector.broadcast %c0_i32_30 : i32 to vector<1x256xi32>
    %75 = arith.cmpi sge, %73, %74 : vector<1x256xi32>
    %c1_i32_31 = arith.constant 1 : i32
    %76 = vector.broadcast %c1_i32_31 : i32 to vector<1x256xi32>
    %77 = arith.addi %21, %76 : vector<1x256xi32>
    %c16_i32_32 = arith.constant 16 : i32
    %78 = vector.broadcast %c16_i32_32 : i32 to vector<1x256xi32>
    %79 = arith.cmpi slt, %77, %78 : vector<1x256xi32>
    %80 = arith.andi %75, %79 : vector<1x256xi1>
    %cst_33 = arith.constant 0.000000e+00 : f32
    %81 = vector.shape_cast %80 : vector<1x256xi1> to vector<1x256xi1>
    %82 = vector.broadcast %81 : vector<1x256xi1> to vector<16x256xi1>
    %83 = vector.broadcast %cst_33 : f32 to vector<16x256xf32>
    %84 = arith.select %82, %71, %83 : vector<16x256xi1>, vector<16x256xf32>
    %85 = arith.truncf %84 : vector<16x256xf32> to vector<16x256xbf16>
    %c0_34 = arith.constant 0 : index
    %c143 = arith.constant 143 : index
    %86 = vector.load %arg5[%c0_34, %c143] : memref<16x401xf32, #tpu.memory_space<vmem>>, vector<16x256xf32>
    %c-1_i32_35 = arith.constant -1 : i32
    %87 = vector.broadcast %c-1_i32_35 : i32 to vector<1x256xi32>
    %88 = arith.addi %21, %87 : vector<1x256xi32>
    %c0_i32_36 = arith.constant 0 : i32
    %89 = vector.broadcast %c0_i32_36 : i32 to vector<1x256xi32>
    %90 = arith.cmpi sge, %88, %89 : vector<1x256xi32>
    %c-1_i32_37 = arith.constant -1 : i32
    %91 = vector.broadcast %c-1_i32_37 : i32 to vector<1x256xi32>
    %92 = arith.addi %21, %91 : vector<1x256xi32>
    %c16_i32_38 = arith.constant 16 : i32
    %93 = vector.broadcast %c16_i32_38 : i32 to vector<1x256xi32>
    %94 = arith.cmpi slt, %92, %93 : vector<1x256xi32>
    %95 = arith.andi %90, %94 : vector<1x256xi1>
    %cst_39 = arith.constant 0.000000e+00 : f32
    %96 = vector.shape_cast %95 : vector<1x256xi1> to vector<1x256xi1>
    %97 = vector.broadcast %96 : vector<1x256xi1> to vector<16x256xi1>
    %98 = vector.broadcast %cst_39 : f32 to vector<16x256xf32>
    %99 = arith.select %97, %86, %98 : vector<16x256xi1>, vector<16x256xf32>
    %100 = arith.truncf %99 : vector<16x256xf32> to vector<16x256xbf16>
    %c0_40 = arith.constant 0 : index
    %c144 = arith.constant 144 : index
    %101 = vector.load %arg5[%c0_40, %c144] : memref<16x401xf32, #tpu.memory_space<vmem>>, vector<16x256xf32>
    %102 = arith.truncf %101 : vector<16x256xf32> to vector<16x256xbf16>
    %c0_41 = arith.constant 0 : index
    %c145 = arith.constant 145 : index
    %103 = vector.load %arg5[%c0_41, %c145] : memref<16x401xf32, #tpu.memory_space<vmem>>, vector<16x256xf32>
    %c1_i32_42 = arith.constant 1 : i32
    %104 = vector.broadcast %c1_i32_42 : i32 to vector<1x256xi32>
    %105 = arith.addi %21, %104 : vector<1x256xi32>
    %c0_i32_43 = arith.constant 0 : i32
    %106 = vector.broadcast %c0_i32_43 : i32 to vector<1x256xi32>
    %107 = arith.cmpi sge, %105, %106 : vector<1x256xi32>
    %c1_i32_44 = arith.constant 1 : i32
    %108 = vector.broadcast %c1_i32_44 : i32 to vector<1x256xi32>
    %109 = arith.addi %21, %108 : vector<1x256xi32>
    %c16_i32_45 = arith.constant 16 : i32
    %110 = vector.broadcast %c16_i32_45 : i32 to vector<1x256xi32>
    %111 = arith.cmpi slt, %109, %110 : vector<1x256xi32>
    %112 = arith.andi %107, %111 : vector<1x256xi1>
    %cst_46 = arith.constant 0.000000e+00 : f32
    %113 = vector.shape_cast %112 : vector<1x256xi1> to vector<1x256xi1>
    %114 = vector.broadcast %113 : vector<1x256xi1> to vector<16x256xi1>
    %115 = vector.broadcast %cst_46 : f32 to vector<16x256xf32>
    %116 = arith.select %114, %103, %115 : vector<16x256xi1>, vector<16x256xf32>
    %117 = arith.truncf %116 : vector<16x256xf32> to vector<16x256xbf16>
    %118 = tpu.concatenate %36, %38, %53, %68, %70, %85, %100, %102, %117 in 0 : vector<16x256xbf16>, vector<16x256xbf16>, vector<16x256xbf16>, vector<16x256xbf16>, vector<16x256xbf16>, vector<16x256xbf16>, vector<16x256xbf16>, vector<16x256xbf16>, vector<16x256xbf16> -> vector<144x256xbf16>
    %c0_47 = arith.constant 0 : index
    %c0_48 = arith.constant 0 : index
    %119 = vector.load %arg2[%c0_47, %c0_48] : memref<4x144xbf16, #tpu.memory_space<vmem>>, vector<4x144xbf16>
    %cst_49 = arith.constant dense<0.000000e+00> : vector<4x256xf32>
    %120 = tpu.matmul %119, %118, %cst_49 {dimension_numbers = #tpu.dot_dimension_numbers<[1], [0], [0], [1], [0, 0, 1, 1], [], []>} : vector<4x144xbf16>, vector<144x256xbf16>, vector<4x256xf32> -> vector<4x256xf32>
    %c0_50 = arith.constant 0 : index
    %c0_51 = arith.constant 0 : index
    %c0_52 = arith.constant 0 : index
    %121 = vector.load %arg3[%c0_50, %c0_51, %c0_52] : memref<1x4x256xf32, #tpu.memory_space<vmem>>, vector<1x4x256xf32>
    %122 = vector.shape_cast %121 : vector<1x4x256xf32> to vector<4x256xf32>
    %123 = vector.shape_cast %120 : vector<4x256xf32> to vector<1x4x256xf32>
    tpu.vector_store %arg3[%c0_50, %c0_51, %c0_52], %123 {strides = array<i32>} : memref<1x4x256xf32, #tpu.memory_space<vmem>>, vector<1x4x256xf32>,
    %cst_53 = arith.constant dense<0.000000e+00> : vector<4xf32>
    %124 = vector.multi_reduction <add>, %120, %cst_53 [1] : vector<4x256xf32> to vector<4xf32>
    %125 = vector.shape_cast %124 : vector<4xf32> to vector<4x1xf32>
    %c0_54 = arith.constant 0 : index
    %c0_55 = arith.constant 0 : index
    %c0_56 = arith.constant 0 : index
    %126 = vector.load %arg4[%c0_54, %c0_55, %c0_56] : memref<1x8x1xf32, #tpu.memory_space<vmem>>, vector<1x4x1xf32>
    %127 = vector.shape_cast %126 : vector<1x4x1xf32> to vector<4x1xf32>
    %128 = vector.shape_cast %125 : vector<4x1xf32> to vector<1x4x1xf32>
    tpu.vector_store %arg4[%c0_54, %c0_55, %c0_56], %128 {strides = array<i32>} : memref<1x8x1xf32, #tpu.memory_space<vmem>>, vector<1x4x1xf32>,
    %129 = arith.mulf %120, %120 : vector<4x256xf32>
    %cst_57 = arith.constant dense<0.000000e+00> : vector<4xf32>
    %130 = vector.multi_reduction <add>, %129, %cst_57 [1] : vector<4x256xf32> to vector<4xf32>
    %131 = vector.shape_cast %130 : vector<4xf32> to vector<4x1xf32>
    %c0_58 = arith.constant 0 : index
    %c4 = arith.constant 4 : index
    %c0_59 = arith.constant 0 : index
    %132 = vector.load %arg4[%c0_58, %c4, %c0_59] : memref<1x8x1xf32, #tpu.memory_space<vmem>>, vector<1x4x1xf32>
    %133 = vector.shape_cast %132 : vector<1x4x1xf32> to vector<4x1xf32>
    %134 = vector.shape_cast %131 : vector<4x1xf32> to vector<1x4x1xf32>
    tpu.vector_store %arg4[%c0_58, %c4, %c0_59], %134 {strides = array<i32>} : memref<1x8x1xf32, #tpu.memory_space<vmem>>, vector<1x4x1xf32>,
    return
  }
  func.func @transform_0(%arg0: i32) -> (i32, i32, i32) {
    %c0_i32 = arith.constant 0 : i32
    %c0_i32_0 = arith.constant 0 : i32
    %c0_i32_1 = arith.constant 0 : i32
    return %arg0, %c0_i32, %c0_i32_0 : i32, i32, i32
  }
  func.func @transform_1(%arg0: i32) -> (i32, i32) {
    %c0_i32 = arith.constant 0 : i32
    %c0_i32_0 = arith.constant 0 : i32
    %c0_i32_1 = arith.constant 0 : i32
    return %c0_i32, %c0_i32_0 : i32, i32
  }
  func.func @transform_2(%arg0: i32) -> (i32, i32, i32) {
    %c0_i32 = arith.constant 0 : i32
    %c0_i32_0 = arith.constant 0 : i32
    %c0_i32_1 = arith.constant 0 : i32
    return %arg0, %c0_i32, %c0_i32_0 : i32, i32, i32
  }
  func.func @transform_3(%arg0: i32) -> (i32, i32, i32) {
    %c0_i32 = arith.constant 0 : i32
    %c0_i32_0 = arith.constant 0 : i32
    %c0_i32_1 = arith.constant 0 : i32
    return %arg0, %c0_i32, %c0_i32_0 : i32, i32, i32
  }
}

module attributes {stable_mosaic.version = 11 : i64} {
  func.func @_deconv_kernel(%arg0: i32, %arg1: memref<1x4x256xf32, #tpu.memory_space<vmem>>, %arg2: memref<4x1xf32, #tpu.memory_space<vmem>>, %arg3: memref<4x1xf32, #tpu.memory_space<vmem>>, %arg4: memref<16x32xbf16, #tpu.memory_space<vmem>>, %arg5: memref<1x16x256xf32, #tpu.memory_space<vmem>>, %arg6: memref<1x32x1xf32, #tpu.memory_space<vmem>>, %arg7: memref<8x401xf32, #tpu.memory_space<vmem>>) attributes {dimension_semantics = [#tpu.dimension_semantics<parallel>], iteration_bounds = array<i64: 2>, scalar_prefetch = 0 : i64, scratch_operands = 1 : i64, tpu.core_type = #tpu.core_type<tc>, window_params = [{transform_indices = @transform_0, window_bounds = array<i64: 1, 4, 256>}, {pipeline_mode = #tpu.pipeline_mode<synchronous>, transform_indices = @transform_1, window_bounds = array<i64: 4, 1>}, {pipeline_mode = #tpu.pipeline_mode<synchronous>, transform_indices = @transform_2, window_bounds = array<i64: 4, 1>}, {pipeline_mode = #tpu.pipeline_mode<synchronous>, transform_indices = @transform_3, window_bounds = array<i64: 16, 32>}, {transform_indices = @transform_4, window_bounds = array<i64: 1, 16, 256>}, {transform_indices = @transform_5, window_bounds = array<i64: 1, 32, 1>}]} {
    %c0 = arith.constant 0 : index
    %c0_0 = arith.constant 0 : index
    %c0_1 = arith.constant 0 : index
    %0 = vector.load %arg1[%c0, %c0_0, %c0_1] : memref<1x4x256xf32, #tpu.memory_space<vmem>>, vector<1x4x256xf32>
    %1 = vector.shape_cast %0 : vector<1x4x256xf32> to vector<4x256xf32>
    %c0_2 = arith.constant 0 : index
    %c0_3 = arith.constant 0 : index
    %2 = vector.load %arg2[%c0_2, %c0_3] : memref<4x1xf32, #tpu.memory_space<vmem>>, vector<4x1xf32>
    %3 = vector.broadcast %2 : vector<4x1xf32> to vector<4x256xf32>
    %4 = arith.mulf %1, %3 : vector<4x256xf32>
    %c0_4 = arith.constant 0 : index
    %c0_5 = arith.constant 0 : index
    %5 = vector.load %arg3[%c0_4, %c0_5] : memref<4x1xf32, #tpu.memory_space<vmem>>, vector<4x1xf32>
    %6 = vector.broadcast %5 : vector<4x1xf32> to vector<4x256xf32>
    %7 = arith.addf %4, %6 : vector<4x256xf32>
    %cst = arith.constant 0.000000e+00 : f32
    %8 = vector.broadcast %cst : f32 to vector<4x256xf32>
    %9 = arith.maximumf %7, %8 : vector<4x256xf32>
    %cst_6 = arith.constant 0.000000e+00 : f32
    %10 = vector.broadcast %cst_6 : f32 to vector<8x401xf32>
    %c0_7 = arith.constant 0 : index
    %c0_8 = arith.constant 0 : index
    %11 = vector.load %arg7[%c0_7, %c0_8] : memref<8x401xf32, #tpu.memory_space<vmem>>, vector<8x401xf32>
    tpu.vector_store %arg7[%c0_7, %c0_8], %10 {strides = array<i32>} : memref<8x401xf32, #tpu.memory_space<vmem>>, vector<8x401xf32>,
    %c0_9 = arith.constant 0 : index
    %c128 = arith.constant 128 : index
    %12 = vector.load %arg7[%c0_9, %c128] : memref<8x401xf32, #tpu.memory_space<vmem>>, vector<4x256xf32>
    tpu.vector_store %arg7[%c0_9, %c128], %9 {strides = array<i32>} : memref<8x401xf32, #tpu.memory_space<vmem>>, vector<4x256xf32>,
    %13 = tpu.iota {dimensions = array<i32: 1>} : vector<1x256xi32>
    %c16_i32 = arith.constant 16 : i32
    %c0_i32 = arith.constant 0 : i32
    %14 = arith.cmpi eq, %c16_i32, %c0_i32 : i32
    %c1_i32 = arith.constant 1 : i32
    %15 = arith.select %14, %c1_i32, %c16_i32 : i32
    %16 = vector.broadcast %15 : i32 to vector<1x256xi32>
    %17 = arith.remsi %13, %16 : vector<1x256xi32>
    %c0_i32_10 = arith.constant 0 : i32
    %18 = vector.broadcast %c0_i32_10 : i32 to vector<1x256xi32>
    %19 = arith.cmpi ne, %17, %18 : vector<1x256xi32>
    %c0_i32_11 = arith.constant 0 : i32
    %20 = vector.broadcast %c0_i32_11 : i32 to vector<1x256xi32>
    %21 = arith.cmpi slt, %17, %20 : vector<1x256xi32>
    %c0_i32_12 = arith.constant 0 : i32
    %22 = arith.cmpi slt, %15, %c0_i32_12 : i32
    %23 = vector.broadcast %22 : i1 to vector<1x256xi1>
    %24 = vector.broadcast %23 : vector<1x256xi1> to vector<1x256xi1>
    %25 = arith.xori %21, %24 : vector<1x256xi1>
    %26 = arith.andi %25, %19 : vector<1x256xi1>
    %27 = vector.broadcast %15 : i32 to vector<1x256xi32>
    %28 = arith.addi %17, %27 : vector<1x256xi32>
    %29 = arith.select %26, %28, %17 : vector<1x256xi1>, vector<1x256xi32>
    %c0_13 = arith.constant 0 : index
    %c128_14 = arith.constant 128 : index
    %30 = vector.load %arg7[%c0_13, %c128_14] : memref<8x401xf32, #tpu.memory_space<vmem>>, vector<8x256xf32>
    %c0_15 = arith.constant 0 : index
    %c129 = arith.constant 129 : index
    %31 = vector.load %arg7[%c0_15, %c129] : memref<8x401xf32, #tpu.memory_space<vmem>>, vector<8x256xf32>
    %c1_i32_16 = arith.constant 1 : i32
    %32 = vector.broadcast %c1_i32_16 : i32 to vector<1x256xi32>
    %33 = arith.addi %29, %32 : vector<1x256xi32>
    %c0_i32_17 = arith.constant 0 : i32
    %34 = vector.broadcast %c0_i32_17 : i32 to vector<1x256xi32>
    %35 = arith.cmpi sge, %33, %34 : vector<1x256xi32>
    %c1_i32_18 = arith.constant 1 : i32
    %36 = vector.broadcast %c1_i32_18 : i32 to vector<1x256xi32>
    %37 = arith.addi %29, %36 : vector<1x256xi32>
    %c16_i32_19 = arith.constant 16 : i32
    %38 = vector.broadcast %c16_i32_19 : i32 to vector<1x256xi32>
    %39 = arith.cmpi slt, %37, %38 : vector<1x256xi32>
    %40 = arith.andi %35, %39 : vector<1x256xi1>
    %cst_20 = arith.constant 0.000000e+00 : f32
    %41 = vector.shape_cast %40 : vector<1x256xi1> to vector<1x256xi1>
    %42 = vector.broadcast %41 : vector<1x256xi1> to vector<8x256xi1>
    %43 = vector.broadcast %cst_20 : f32 to vector<8x256xf32>
    %44 = arith.select %42, %31, %43 : vector<8x256xi1>, vector<8x256xf32>
    %c0_21 = arith.constant 0 : index
    %c144 = arith.constant 144 : index
    %45 = vector.load %arg7[%c0_21, %c144] : memref<8x401xf32, #tpu.memory_space<vmem>>, vector<8x256xf32>
    %c0_22 = arith.constant 0 : index
    %c145 = arith.constant 145 : index
    %46 = vector.load %arg7[%c0_22, %c145] : memref<8x401xf32, #tpu.memory_space<vmem>>, vector<8x256xf32>
    %c1_i32_23 = arith.constant 1 : i32
    %47 = vector.broadcast %c1_i32_23 : i32 to vector<1x256xi32>
    %48 = arith.addi %29, %47 : vector<1x256xi32>
    %c0_i32_24 = arith.constant 0 : i32
    %49 = vector.broadcast %c0_i32_24 : i32 to vector<1x256xi32>
    %50 = arith.cmpi sge, %48, %49 : vector<1x256xi32>
    %c1_i32_25 = arith.constant 1 : i32
    %51 = vector.broadcast %c1_i32_25 : i32 to vector<1x256xi32>
    %52 = arith.addi %29, %51 : vector<1x256xi32>
    %c16_i32_26 = arith.constant 16 : i32
    %53 = vector.broadcast %c16_i32_26 : i32 to vector<1x256xi32>
    %54 = arith.cmpi slt, %52, %53 : vector<1x256xi32>
    %55 = arith.andi %50, %54 : vector<1x256xi1>
    %cst_27 = arith.constant 0.000000e+00 : f32
    %56 = vector.shape_cast %55 : vector<1x256xi1> to vector<1x256xi1>
    %57 = vector.broadcast %56 : vector<1x256xi1> to vector<8x256xi1>
    %58 = vector.broadcast %cst_27 : f32 to vector<8x256xf32>
    %59 = arith.select %57, %46, %58 : vector<8x256xi1>, vector<8x256xf32>
    %60 = tpu.concatenate %30, %44, %45, %59 in 0 : vector<8x256xf32>, vector<8x256xf32>, vector<8x256xf32>, vector<8x256xf32> -> vector<32x256xf32>
    %61 = arith.truncf %60 : vector<32x256xf32> to vector<32x256xbf16>
    %c0_28 = arith.constant 0 : index
    %c0_29 = arith.constant 0 : index
    %62 = vector.load %arg4[%c0_28, %c0_29] : memref<16x32xbf16, #tpu.memory_space<vmem>>, vector<16x32xbf16>
    %cst_30 = arith.constant dense<0.000000e+00> : vector<16x256xf32>
    %63 = tpu.matmul %62, %61, %cst_30 {dimension_numbers = #tpu.dot_dimension_numbers<[1], [0], [0], [1], [0, 0, 1, 1], [], []>} : vector<16x32xbf16>, vector<32x256xbf16>, vector<16x256xf32> -> vector<16x256xf32>
    %c0_31 = arith.constant 0 : index
    %c0_32 = arith.constant 0 : index
    %c0_33 = arith.constant 0 : index
    %64 = vector.load %arg5[%c0_31, %c0_32, %c0_33] : memref<1x16x256xf32, #tpu.memory_space<vmem>>, vector<1x16x256xf32>
    %65 = vector.shape_cast %64 : vector<1x16x256xf32> to vector<16x256xf32>
    %66 = vector.shape_cast %63 : vector<16x256xf32> to vector<1x16x256xf32>
    tpu.vector_store %arg5[%c0_31, %c0_32, %c0_33], %66 {strides = array<i32>} : memref<1x16x256xf32, #tpu.memory_space<vmem>>, vector<1x16x256xf32>,
    %cst_34 = arith.constant dense<0.000000e+00> : vector<16xf32>
    %67 = vector.multi_reduction <add>, %63, %cst_34 [1] : vector<16x256xf32> to vector<16xf32>
    %68 = vector.shape_cast %67 : vector<16xf32> to vector<16x1xf32>
    %c0_35 = arith.constant 0 : index
    %c0_36 = arith.constant 0 : index
    %c0_37 = arith.constant 0 : index
    %69 = vector.load %arg6[%c0_35, %c0_36, %c0_37] : memref<1x32x1xf32, #tpu.memory_space<vmem>>, vector<1x16x1xf32>
    %70 = vector.shape_cast %69 : vector<1x16x1xf32> to vector<16x1xf32>
    %71 = vector.shape_cast %68 : vector<16x1xf32> to vector<1x16x1xf32>
    tpu.vector_store %arg6[%c0_35, %c0_36, %c0_37], %71 {strides = array<i32>} : memref<1x32x1xf32, #tpu.memory_space<vmem>>, vector<1x16x1xf32>,
    %72 = arith.mulf %63, %63 : vector<16x256xf32>
    %cst_38 = arith.constant dense<0.000000e+00> : vector<16xf32>
    %73 = vector.multi_reduction <add>, %72, %cst_38 [1] : vector<16x256xf32> to vector<16xf32>
    %74 = vector.shape_cast %73 : vector<16xf32> to vector<16x1xf32>
    %c0_39 = arith.constant 0 : index
    %c16 = arith.constant 16 : index
    %c0_40 = arith.constant 0 : index
    %75 = vector.load %arg6[%c0_39, %c16, %c0_40] : memref<1x32x1xf32, #tpu.memory_space<vmem>>, vector<1x16x1xf32>
    %76 = vector.shape_cast %75 : vector<1x16x1xf32> to vector<16x1xf32>
    %77 = vector.shape_cast %74 : vector<16x1xf32> to vector<1x16x1xf32>
    tpu.vector_store %arg6[%c0_39, %c16, %c0_40], %77 {strides = array<i32>} : memref<1x32x1xf32, #tpu.memory_space<vmem>>, vector<1x16x1xf32>,
    return
  }
  func.func @transform_0(%arg0: i32) -> (i32, i32, i32) {
    %c0_i32 = arith.constant 0 : i32
    %c0_i32_0 = arith.constant 0 : i32
    %c0_i32_1 = arith.constant 0 : i32
    return %arg0, %c0_i32, %c0_i32_0 : i32, i32, i32
  }
  func.func @transform_1(%arg0: i32) -> (i32, i32) {
    %c0_i32 = arith.constant 0 : i32
    %c0_i32_0 = arith.constant 0 : i32
    %c0_i32_1 = arith.constant 0 : i32
    return %c0_i32, %c0_i32_0 : i32, i32
  }
  func.func @transform_2(%arg0: i32) -> (i32, i32) {
    %c0_i32 = arith.constant 0 : i32
    %c0_i32_0 = arith.constant 0 : i32
    %c0_i32_1 = arith.constant 0 : i32
    return %c0_i32, %c0_i32_0 : i32, i32
  }
  func.func @transform_3(%arg0: i32) -> (i32, i32) {
    %c0_i32 = arith.constant 0 : i32
    %c0_i32_0 = arith.constant 0 : i32
    %c0_i32_1 = arith.constant 0 : i32
    return %c0_i32, %c0_i32_0 : i32, i32
  }
  func.func @transform_4(%arg0: i32) -> (i32, i32, i32) {
    %c0_i32 = arith.constant 0 : i32
    %c0_i32_0 = arith.constant 0 : i32
    %c0_i32_1 = arith.constant 0 : i32
    return %arg0, %c0_i32, %c0_i32_0 : i32, i32, i32
  }
  func.func @transform_5(%arg0: i32) -> (i32, i32, i32) {
    %c0_i32 = arith.constant 0 : i32
    %c0_i32_0 = arith.constant 0 : i32
    %c0_i32_1 = arith.constant 0 : i32
    return %arg0, %c0_i32, %c0_i32_0 : i32, i32, i32
  }
}

module attributes {stable_mosaic.version = 11 : i64} {
  func.func @_sep_act_kernel(%arg0: i32, %arg1: memref<1x16x256xf32, #tpu.memory_space<vmem>>, %arg2: memref<16x1xf32, #tpu.memory_space<vmem>>, %arg3: memref<16x1xf32, #tpu.memory_space<vmem>>, %arg4: memref<32x144xbf16, #tpu.memory_space<vmem>>, %arg5: memref<1x32x256xf32, #tpu.memory_space<vmem>>, %arg6: memref<1x64x1xf32, #tpu.memory_space<vmem>>, %arg7: memref<16x401xf32, #tpu.memory_space<vmem>>) attributes {dimension_semantics = [#tpu.dimension_semantics<parallel>], iteration_bounds = array<i64: 2>, scalar_prefetch = 0 : i64, scratch_operands = 1 : i64, tpu.core_type = #tpu.core_type<tc>, window_params = [{transform_indices = @transform_0, window_bounds = array<i64: 1, 16, 256>}, {pipeline_mode = #tpu.pipeline_mode<synchronous>, transform_indices = @transform_1, window_bounds = array<i64: 16, 1>}, {pipeline_mode = #tpu.pipeline_mode<synchronous>, transform_indices = @transform_2, window_bounds = array<i64: 16, 1>}, {pipeline_mode = #tpu.pipeline_mode<synchronous>, transform_indices = @transform_3, window_bounds = array<i64: 32, 144>}, {transform_indices = @transform_4, window_bounds = array<i64: 1, 32, 256>}, {transform_indices = @transform_5, window_bounds = array<i64: 1, 64, 1>}]} {
    %c0 = arith.constant 0 : index
    %c0_0 = arith.constant 0 : index
    %c0_1 = arith.constant 0 : index
    %0 = vector.load %arg1[%c0, %c0_0, %c0_1] : memref<1x16x256xf32, #tpu.memory_space<vmem>>, vector<1x16x256xf32>
    %1 = vector.shape_cast %0 : vector<1x16x256xf32> to vector<16x256xf32>
    %c0_2 = arith.constant 0 : index
    %c0_3 = arith.constant 0 : index
    %2 = vector.load %arg2[%c0_2, %c0_3] : memref<16x1xf32, #tpu.memory_space<vmem>>, vector<16x1xf32>
    %3 = vector.broadcast %2 : vector<16x1xf32> to vector<16x256xf32>
    %4 = arith.mulf %1, %3 : vector<16x256xf32>
    %c0_4 = arith.constant 0 : index
    %c0_5 = arith.constant 0 : index
    %5 = vector.load %arg3[%c0_4, %c0_5] : memref<16x1xf32, #tpu.memory_space<vmem>>, vector<16x1xf32>
    %6 = vector.broadcast %5 : vector<16x1xf32> to vector<16x256xf32>
    %7 = arith.addf %4, %6 : vector<16x256xf32>
    %cst = arith.constant 0.000000e+00 : f32
    %8 = vector.broadcast %cst : f32 to vector<16x256xf32>
    %9 = arith.maximumf %7, %8 : vector<16x256xf32>
    %cst_6 = arith.constant 0.000000e+00 : f32
    %10 = vector.broadcast %cst_6 : f32 to vector<16x401xf32>
    %c0_7 = arith.constant 0 : index
    %c0_8 = arith.constant 0 : index
    %11 = vector.load %arg7[%c0_7, %c0_8] : memref<16x401xf32, #tpu.memory_space<vmem>>, vector<16x401xf32>
    tpu.vector_store %arg7[%c0_7, %c0_8], %10 {strides = array<i32>} : memref<16x401xf32, #tpu.memory_space<vmem>>, vector<16x401xf32>,
    %c0_9 = arith.constant 0 : index
    %c128 = arith.constant 128 : index
    %12 = vector.load %arg7[%c0_9, %c128] : memref<16x401xf32, #tpu.memory_space<vmem>>, vector<16x256xf32>
    tpu.vector_store %arg7[%c0_9, %c128], %9 {strides = array<i32>} : memref<16x401xf32, #tpu.memory_space<vmem>>, vector<16x256xf32>,
    %13 = tpu.iota {dimensions = array<i32: 1>} : vector<1x256xi32>
    %c16_i32 = arith.constant 16 : i32
    %c0_i32 = arith.constant 0 : i32
    %14 = arith.cmpi eq, %c16_i32, %c0_i32 : i32
    %c1_i32 = arith.constant 1 : i32
    %15 = arith.select %14, %c1_i32, %c16_i32 : i32
    %16 = vector.broadcast %15 : i32 to vector<1x256xi32>
    %17 = arith.remsi %13, %16 : vector<1x256xi32>
    %c0_i32_10 = arith.constant 0 : i32
    %18 = vector.broadcast %c0_i32_10 : i32 to vector<1x256xi32>
    %19 = arith.cmpi ne, %17, %18 : vector<1x256xi32>
    %c0_i32_11 = arith.constant 0 : i32
    %20 = vector.broadcast %c0_i32_11 : i32 to vector<1x256xi32>
    %21 = arith.cmpi slt, %17, %20 : vector<1x256xi32>
    %c0_i32_12 = arith.constant 0 : i32
    %22 = arith.cmpi slt, %15, %c0_i32_12 : i32
    %23 = vector.broadcast %22 : i1 to vector<1x256xi1>
    %24 = vector.broadcast %23 : vector<1x256xi1> to vector<1x256xi1>
    %25 = arith.xori %21, %24 : vector<1x256xi1>
    %26 = arith.andi %25, %19 : vector<1x256xi1>
    %27 = vector.broadcast %15 : i32 to vector<1x256xi32>
    %28 = arith.addi %17, %27 : vector<1x256xi32>
    %29 = arith.select %26, %28, %17 : vector<1x256xi1>, vector<1x256xi32>
    %c0_13 = arith.constant 0 : index
    %c111 = arith.constant 111 : index
    %30 = vector.load %arg7[%c0_13, %c111] : memref<16x401xf32, #tpu.memory_space<vmem>>, vector<16x256xf32>
    %c-1_i32 = arith.constant -1 : i32
    %31 = vector.broadcast %c-1_i32 : i32 to vector<1x256xi32>
    %32 = arith.addi %29, %31 : vector<1x256xi32>
    %c0_i32_14 = arith.constant 0 : i32
    %33 = vector.broadcast %c0_i32_14 : i32 to vector<1x256xi32>
    %34 = arith.cmpi sge, %32, %33 : vector<1x256xi32>
    %c-1_i32_15 = arith.constant -1 : i32
    %35 = vector.broadcast %c-1_i32_15 : i32 to vector<1x256xi32>
    %36 = arith.addi %29, %35 : vector<1x256xi32>
    %c16_i32_16 = arith.constant 16 : i32
    %37 = vector.broadcast %c16_i32_16 : i32 to vector<1x256xi32>
    %38 = arith.cmpi slt, %36, %37 : vector<1x256xi32>
    %39 = arith.andi %34, %38 : vector<1x256xi1>
    %cst_17 = arith.constant 0.000000e+00 : f32
    %40 = vector.shape_cast %39 : vector<1x256xi1> to vector<1x256xi1>
    %41 = vector.broadcast %40 : vector<1x256xi1> to vector<16x256xi1>
    %42 = vector.broadcast %cst_17 : f32 to vector<16x256xf32>
    %43 = arith.select %41, %30, %42 : vector<16x256xi1>, vector<16x256xf32>
    %44 = arith.truncf %43 : vector<16x256xf32> to vector<16x256xbf16>
    %c0_18 = arith.constant 0 : index
    %c112 = arith.constant 112 : index
    %45 = vector.load %arg7[%c0_18, %c112] : memref<16x401xf32, #tpu.memory_space<vmem>>, vector<16x256xf32>
    %46 = arith.truncf %45 : vector<16x256xf32> to vector<16x256xbf16>
    %c0_19 = arith.constant 0 : index
    %c113 = arith.constant 113 : index
    %47 = vector.load %arg7[%c0_19, %c113] : memref<16x401xf32, #tpu.memory_space<vmem>>, vector<16x256xf32>
    %c1_i32_20 = arith.constant 1 : i32
    %48 = vector.broadcast %c1_i32_20 : i32 to vector<1x256xi32>
    %49 = arith.addi %29, %48 : vector<1x256xi32>
    %c0_i32_21 = arith.constant 0 : i32
    %50 = vector.broadcast %c0_i32_21 : i32 to vector<1x256xi32>
    %51 = arith.cmpi sge, %49, %50 : vector<1x256xi32>
    %c1_i32_22 = arith.constant 1 : i32
    %52 = vector.broadcast %c1_i32_22 : i32 to vector<1x256xi32>
    %53 = arith.addi %29, %52 : vector<1x256xi32>
    %c16_i32_23 = arith.constant 16 : i32
    %54 = vector.broadcast %c16_i32_23 : i32 to vector<1x256xi32>
    %55 = arith.cmpi slt, %53, %54 : vector<1x256xi32>
    %56 = arith.andi %51, %55 : vector<1x256xi1>
    %cst_24 = arith.constant 0.000000e+00 : f32
    %57 = vector.shape_cast %56 : vector<1x256xi1> to vector<1x256xi1>
    %58 = vector.broadcast %57 : vector<1x256xi1> to vector<16x256xi1>
    %59 = vector.broadcast %cst_24 : f32 to vector<16x256xf32>
    %60 = arith.select %58, %47, %59 : vector<16x256xi1>, vector<16x256xf32>
    %61 = arith.truncf %60 : vector<16x256xf32> to vector<16x256xbf16>
    %c0_25 = arith.constant 0 : index
    %c127 = arith.constant 127 : index
    %62 = vector.load %arg7[%c0_25, %c127] : memref<16x401xf32, #tpu.memory_space<vmem>>, vector<16x256xf32>
    %c-1_i32_26 = arith.constant -1 : i32
    %63 = vector.broadcast %c-1_i32_26 : i32 to vector<1x256xi32>
    %64 = arith.addi %29, %63 : vector<1x256xi32>
    %c0_i32_27 = arith.constant 0 : i32
    %65 = vector.broadcast %c0_i32_27 : i32 to vector<1x256xi32>
    %66 = arith.cmpi sge, %64, %65 : vector<1x256xi32>
    %c-1_i32_28 = arith.constant -1 : i32
    %67 = vector.broadcast %c-1_i32_28 : i32 to vector<1x256xi32>
    %68 = arith.addi %29, %67 : vector<1x256xi32>
    %c16_i32_29 = arith.constant 16 : i32
    %69 = vector.broadcast %c16_i32_29 : i32 to vector<1x256xi32>
    %70 = arith.cmpi slt, %68, %69 : vector<1x256xi32>
    %71 = arith.andi %66, %70 : vector<1x256xi1>
    %cst_30 = arith.constant 0.000000e+00 : f32
    %72 = vector.shape_cast %71 : vector<1x256xi1> to vector<1x256xi1>
    %73 = vector.broadcast %72 : vector<1x256xi1> to vector<16x256xi1>
    %74 = vector.broadcast %cst_30 : f32 to vector<16x256xf32>
    %75 = arith.select %73, %62, %74 : vector<16x256xi1>, vector<16x256xf32>
    %76 = arith.truncf %75 : vector<16x256xf32> to vector<16x256xbf16>
    %c0_31 = arith.constant 0 : index
    %c128_32 = arith.constant 128 : index
    %77 = vector.load %arg7[%c0_31, %c128_32] : memref<16x401xf32, #tpu.memory_space<vmem>>, vector<16x256xf32>
    %78 = arith.truncf %77 : vector<16x256xf32> to vector<16x256xbf16>
    %c0_33 = arith.constant 0 : index
    %c129 = arith.constant 129 : index
    %79 = vector.load %arg7[%c0_33, %c129] : memref<16x401xf32, #tpu.memory_space<vmem>>, vector<16x256xf32>
    %c1_i32_34 = arith.constant 1 : i32
    %80 = vector.broadcast %c1_i32_34 : i32 to vector<1x256xi32>
    %81 = arith.addi %29, %80 : vector<1x256xi32>
    %c0_i32_35 = arith.constant 0 : i32
    %82 = vector.broadcast %c0_i32_35 : i32 to vector<1x256xi32>
    %83 = arith.cmpi sge, %81, %82 : vector<1x256xi32>
    %c1_i32_36 = arith.constant 1 : i32
    %84 = vector.broadcast %c1_i32_36 : i32 to vector<1x256xi32>
    %85 = arith.addi %29, %84 : vector<1x256xi32>
    %c16_i32_37 = arith.constant 16 : i32
    %86 = vector.broadcast %c16_i32_37 : i32 to vector<1x256xi32>
    %87 = arith.cmpi slt, %85, %86 : vector<1x256xi32>
    %88 = arith.andi %83, %87 : vector<1x256xi1>
    %cst_38 = arith.constant 0.000000e+00 : f32
    %89 = vector.shape_cast %88 : vector<1x256xi1> to vector<1x256xi1>
    %90 = vector.broadcast %89 : vector<1x256xi1> to vector<16x256xi1>
    %91 = vector.broadcast %cst_38 : f32 to vector<16x256xf32>
    %92 = arith.select %90, %79, %91 : vector<16x256xi1>, vector<16x256xf32>
    %93 = arith.truncf %92 : vector<16x256xf32> to vector<16x256xbf16>
    %c0_39 = arith.constant 0 : index
    %c143 = arith.constant 143 : index
    %94 = vector.load %arg7[%c0_39, %c143] : memref<16x401xf32, #tpu.memory_space<vmem>>, vector<16x256xf32>
    %c-1_i32_40 = arith.constant -1 : i32
    %95 = vector.broadcast %c-1_i32_40 : i32 to vector<1x256xi32>
    %96 = arith.addi %29, %95 : vector<1x256xi32>
    %c0_i32_41 = arith.constant 0 : i32
    %97 = vector.broadcast %c0_i32_41 : i32 to vector<1x256xi32>
    %98 = arith.cmpi sge, %96, %97 : vector<1x256xi32>
    %c-1_i32_42 = arith.constant -1 : i32
    %99 = vector.broadcast %c-1_i32_42 : i32 to vector<1x256xi32>
    %100 = arith.addi %29, %99 : vector<1x256xi32>
    %c16_i32_43 = arith.constant 16 : i32
    %101 = vector.broadcast %c16_i32_43 : i32 to vector<1x256xi32>
    %102 = arith.cmpi slt, %100, %101 : vector<1x256xi32>
    %103 = arith.andi %98, %102 : vector<1x256xi1>
    %cst_44 = arith.constant 0.000000e+00 : f32
    %104 = vector.shape_cast %103 : vector<1x256xi1> to vector<1x256xi1>
    %105 = vector.broadcast %104 : vector<1x256xi1> to vector<16x256xi1>
    %106 = vector.broadcast %cst_44 : f32 to vector<16x256xf32>
    %107 = arith.select %105, %94, %106 : vector<16x256xi1>, vector<16x256xf32>
    %108 = arith.truncf %107 : vector<16x256xf32> to vector<16x256xbf16>
    %c0_45 = arith.constant 0 : index
    %c144 = arith.constant 144 : index
    %109 = vector.load %arg7[%c0_45, %c144] : memref<16x401xf32, #tpu.memory_space<vmem>>, vector<16x256xf32>
    %110 = arith.truncf %109 : vector<16x256xf32> to vector<16x256xbf16>
    %c0_46 = arith.constant 0 : index
    %c145 = arith.constant 145 : index
    %111 = vector.load %arg7[%c0_46, %c145] : memref<16x401xf32, #tpu.memory_space<vmem>>, vector<16x256xf32>
    %c1_i32_47 = arith.constant 1 : i32
    %112 = vector.broadcast %c1_i32_47 : i32 to vector<1x256xi32>
    %113 = arith.addi %29, %112 : vector<1x256xi32>
    %c0_i32_48 = arith.constant 0 : i32
    %114 = vector.broadcast %c0_i32_48 : i32 to vector<1x256xi32>
    %115 = arith.cmpi sge, %113, %114 : vector<1x256xi32>
    %c1_i32_49 = arith.constant 1 : i32
    %116 = vector.broadcast %c1_i32_49 : i32 to vector<1x256xi32>
    %117 = arith.addi %29, %116 : vector<1x256xi32>
    %c16_i32_50 = arith.constant 16 : i32
    %118 = vector.broadcast %c16_i32_50 : i32 to vector<1x256xi32>
    %119 = arith.cmpi slt, %117, %118 : vector<1x256xi32>
    %120 = arith.andi %115, %119 : vector<1x256xi1>
    %cst_51 = arith.constant 0.000000e+00 : f32
    %121 = vector.shape_cast %120 : vector<1x256xi1> to vector<1x256xi1>
    %122 = vector.broadcast %121 : vector<1x256xi1> to vector<16x256xi1>
    %123 = vector.broadcast %cst_51 : f32 to vector<16x256xf32>
    %124 = arith.select %122, %111, %123 : vector<16x256xi1>, vector<16x256xf32>
    %125 = arith.truncf %124 : vector<16x256xf32> to vector<16x256xbf16>
    %126 = tpu.concatenate %44, %46, %61, %76, %78, %93, %108, %110, %125 in 0 : vector<16x256xbf16>, vector<16x256xbf16>, vector<16x256xbf16>, vector<16x256xbf16>, vector<16x256xbf16>, vector<16x256xbf16>, vector<16x256xbf16>, vector<16x256xbf16>, vector<16x256xbf16> -> vector<144x256xbf16>
    %c0_52 = arith.constant 0 : index
    %c0_53 = arith.constant 0 : index
    %127 = vector.load %arg4[%c0_52, %c0_53] : memref<32x144xbf16, #tpu.memory_space<vmem>>, vector<32x144xbf16>
    %cst_54 = arith.constant dense<0.000000e+00> : vector<32x256xf32>
    %128 = tpu.matmul %127, %126, %cst_54 {dimension_numbers = #tpu.dot_dimension_numbers<[1], [0], [0], [1], [0, 0, 1, 1], [], []>} : vector<32x144xbf16>, vector<144x256xbf16>, vector<32x256xf32> -> vector<32x256xf32>
    %c0_55 = arith.constant 0 : index
    %c0_56 = arith.constant 0 : index
    %c0_57 = arith.constant 0 : index
    %129 = vector.load %arg5[%c0_55, %c0_56, %c0_57] : memref<1x32x256xf32, #tpu.memory_space<vmem>>, vector<1x32x256xf32>
    %130 = vector.shape_cast %129 : vector<1x32x256xf32> to vector<32x256xf32>
    %131 = vector.shape_cast %128 : vector<32x256xf32> to vector<1x32x256xf32>
    tpu.vector_store %arg5[%c0_55, %c0_56, %c0_57], %131 {strides = array<i32>} : memref<1x32x256xf32, #tpu.memory_space<vmem>>, vector<1x32x256xf32>,
    %cst_58 = arith.constant dense<0.000000e+00> : vector<32xf32>
    %132 = vector.multi_reduction <add>, %128, %cst_58 [1] : vector<32x256xf32> to vector<32xf32>
    %133 = vector.shape_cast %132 : vector<32xf32> to vector<32x1xf32>
    %c0_59 = arith.constant 0 : index
    %c0_60 = arith.constant 0 : index
    %c0_61 = arith.constant 0 : index
    %134 = vector.load %arg6[%c0_59, %c0_60, %c0_61] : memref<1x64x1xf32, #tpu.memory_space<vmem>>, vector<1x32x1xf32>
    %135 = vector.shape_cast %134 : vector<1x32x1xf32> to vector<32x1xf32>
    %136 = vector.shape_cast %133 : vector<32x1xf32> to vector<1x32x1xf32>
    tpu.vector_store %arg6[%c0_59, %c0_60, %c0_61], %136 {strides = array<i32>} : memref<1x64x1xf32, #tpu.memory_space<vmem>>, vector<1x32x1xf32>,
    %137 = arith.mulf %128, %128 : vector<32x256xf32>
    %cst_62 = arith.constant dense<0.000000e+00> : vector<32xf32>
    %138 = vector.multi_reduction <add>, %137, %cst_62 [1] : vector<32x256xf32> to vector<32xf32>
    %139 = vector.shape_cast %138 : vector<32xf32> to vector<32x1xf32>
    %c0_63 = arith.constant 0 : index
    %c32 = arith.constant 32 : index
    %c0_64 = arith.constant 0 : index
    %140 = vector.load %arg6[%c0_63, %c32, %c0_64] : memref<1x64x1xf32, #tpu.memory_space<vmem>>, vector<1x32x1xf32>
    %141 = vector.shape_cast %140 : vector<1x32x1xf32> to vector<32x1xf32>
    %142 = vector.shape_cast %139 : vector<32x1xf32> to vector<1x32x1xf32>
    tpu.vector_store %arg6[%c0_63, %c32, %c0_64], %142 {strides = array<i32>} : memref<1x64x1xf32, #tpu.memory_space<vmem>>, vector<1x32x1xf32>,
    return
  }
  func.func @transform_0(%arg0: i32) -> (i32, i32, i32) {
    %c0_i32 = arith.constant 0 : i32
    %c0_i32_0 = arith.constant 0 : i32
    %c0_i32_1 = arith.constant 0 : i32
    return %arg0, %c0_i32, %c0_i32_0 : i32, i32, i32
  }
  func.func @transform_1(%arg0: i32) -> (i32, i32) {
    %c0_i32 = arith.constant 0 : i32
    %c0_i32_0 = arith.constant 0 : i32
    %c0_i32_1 = arith.constant 0 : i32
    return %c0_i32, %c0_i32_0 : i32, i32
  }
  func.func @transform_2(%arg0: i32) -> (i32, i32) {
    %c0_i32 = arith.constant 0 : i32
    %c0_i32_0 = arith.constant 0 : i32
    %c0_i32_1 = arith.constant 0 : i32
    return %c0_i32, %c0_i32_0 : i32, i32
  }
  func.func @transform_3(%arg0: i32) -> (i32, i32) {
    %c0_i32 = arith.constant 0 : i32
    %c0_i32_0 = arith.constant 0 : i32
    %c0_i32_1 = arith.constant 0 : i32
    return %c0_i32, %c0_i32_0 : i32, i32
  }
  func.func @transform_4(%arg0: i32) -> (i32, i32, i32) {
    %c0_i32 = arith.constant 0 : i32
    %c0_i32_0 = arith.constant 0 : i32
    %c0_i32_1 = arith.constant 0 : i32
    return %arg0, %c0_i32, %c0_i32_0 : i32, i32, i32
  }
  func.func @transform_5(%arg0: i32) -> (i32, i32, i32) {
    %c0_i32 = arith.constant 0 : i32
    %c0_i32_0 = arith.constant 0 : i32
    %c0_i32_1 = arith.constant 0 : i32
    return %arg0, %c0_i32, %c0_i32_0 : i32, i32, i32
  }
}

</mosaic_0001>

<llo_original>
// kernel: squeeze.8
$region0: #{squeeze.8}
  %s0 = inlined_call_operand.vmem [shape: f32[2,16], index: 0, kind: input, shape index: {}]
  %s1 = inlined_call_operand.vmem [shape: f32[8,4], index: 1, kind: output, shape index: {}]
  $region1: #{squeeze.8} parent=0
    #allocation0 [shape = 'u8[4096]{0}', space=vmem, size = 0x1000, scoped, tag = 'scoped mem for input reshape']
    %s3 = sshll.u32 1, 2
    %s4 = ssub.s32 %s3, 1
    %v5 = vld [vmem:[%s0] sm:%s4]
    %6 = vst [vmem:[#allocation0] sm:%s4] %v5
    %v7 = vld [vmem:[#allocation0] sm:$0x3]
    %vm8 = vcmask 31744
    %9 = vst.msk [vmem:[%s1] ss:$4 sm:$0x3] %vm8, %v7
    %v10 = vld [vmem:[#allocation0] sm:$0x3]
    %11 = vrot.lane.b32.xlu0 %v10, 124
    %v12 = vpop.permute.xlu0 %11
    %vm13 = vcmask 31744
    %s14 = scalar_lea.vmem %s1, 1
    %15 = vst.msk [vmem:[%s14] ss:$4 sm:$0x3] %vm13, %v12
    %v16 = vld [vmem:[#allocation0] sm:$0x3]
    %17 = vrot.lane.b32.xlu0 %v16, 120
    %v18 = vpop.permute.xlu0 %17
    %vm19 = vcmask 31744
    %s20 = scalar_lea.vmem %s1, 2
    %21 = vst.msk [vmem:[%s20] ss:$4 sm:$0x3] %vm19, %v18
    %v22 = vld [vmem:[#allocation0] sm:$0x3]
    %23 = vrot.lane.b32.xlu0 %v22, 116
    %v24 = vpop.permute.xlu0 %23
    %vm25 = vcmask 31744
    %s26 = scalar_lea.vmem %s1, 3
    %27 = vst.msk [vmem:[%s26] ss:$4 sm:$0x3] %vm25, %v24

// kernel: tile.18
$region0: #{tile.18}
  #allocation0 [shape = 's32[1]{0}', space=sflag, size = 0x4, scoped, tag = 'scoped memory for tile.18']
  %s0 = inlined_call_operand.vmem [shape: f32[4], index: 0, kind: input, shape index: {}]
  %s1 = inlined_call_operand.vmem [shape: f32[4,4], index: 1, kind: output, shape index: {}]
  // Predicated region
  $region2: #{tile.18} parent=0 // pred_check
    _
  $region3: #{tile.18} parent=0 // pred_check_branch
    %3 = sbr.rel (0) target = $region5
  $region4: #{tile.18} parent=0 // pred_region
    _
  $region5: #{tile.18} parent=0 // pred_fallthru
    _
  %v4 = vld [vmem:[%s0] ss:$0 sm:$0xff]
  %5 = vst [vmem:[%s1] sm:$0xf] %v4

// kernel: tile.0
$region0: #{tile.0}
  %s0 = inlined_call_operand.vmem [shape: f32[4,4], index: 0, kind: input, shape index: {}]
  %s1 = inlined_call_operand.vmem [shape: f32[16,1], index: 1, kind: output, shape index: {}]
  $region1: #{tile.0} parent=0
    #allocation0 [shape = 'u8[4096]{0}', space=vmem, size = 0x1000, scoped, tag = 'scoped mem for input reshape']
    %s3 = sshll.u32 1, 4
    %s4 = ssub.s32 %s3, 1
    %v5 = vld [vmem:[%s0] sm:%s4]
    %6 = vst [vmem:[#allocation0] sm:%s4] %v5
    %v7 = vld [vmem:[#allocation0] sm:$0xf]
    %vm8 = vcmask 7168
    %9 = vst.msk [vmem:[%s1] ss:$4 sm:$0xf] %vm8, %v7
    %v10 = vld [vmem:[#allocation0] sm:$0xf]
    %11 = vrot.lane.b32.xlu0 %v10, 127
    %v12 = vpop.permute.xlu0 %11
    %vm13 = vcmask 7168
    %s14 = scalar_lea.vmem %s1, 1
    %15 = vst.msk [vmem:[%s14] ss:$4 sm:$0xf] %vm13, %v12
    %v16 = vld [vmem:[#allocation0] sm:$0xf]
    %17 = vrot.lane.b32.xlu0 %v16, 126
    %v18 = vpop.permute.xlu0 %17
    %vm19 = vcmask 7168
    %s20 = scalar_lea.vmem %s1, 2
    %21 = vst.msk [vmem:[%s20] ss:$4 sm:$0xf] %vm19, %v18
    %v22 = vld [vmem:[#allocation0] sm:$0xf]
    %23 = vrot.lane.b32.xlu0 %v22, 125
    %v24 = vpop.permute.xlu0 %23
    %vm25 = vcmask 7168
    %s26 = scalar_lea.vmem %s1, 3
    %27 = vst.msk [vmem:[%s26] ss:$4 sm:$0xf] %vm25, %v24

// kernel: squeeze.10
$region0: #{squeeze.10}
  %s0 = inlined_call_operand.vmem [shape: f32[2,32], index: 0, kind: input, shape index: {}]
  %s1 = inlined_call_operand.vmem [shape: f32[8,8], index: 1, kind: output, shape index: {}]
  $region1: #{squeeze.10} parent=0
    #allocation0 [shape = 'u8[4096]{0}', space=vmem, size = 0x1000, scoped, tag = 'scoped mem for input reshape']
    %s3 = sshll.u32 1, 2
    %s4 = ssub.s32 %s3, 1
    %v5 = vld [vmem:[%s0] sm:%s4]
    %6 = vst [vmem:[#allocation0] sm:%s4] %v5
    %v7 = vld [vmem:[#allocation0] sm:$0x3]
    %vm8 = vcmask 64512
    %9 = vst.msk [vmem:[%s1] ss:$4 sm:$0x3] %vm8, %v7
    %v10 = vld [vmem:[#allocation0] sm:$0x3]
    %11 = vrot.lane.b32.xlu0 %v10, 120
    %v12 = vpop.permute.xlu0 %11
    %vm13 = vcmask 64512
    %s14 = scalar_lea.vmem %s1, 1
    %15 = vst.msk [vmem:[%s14] ss:$4 sm:$0x3] %vm13, %v12
    %v16 = vld [vmem:[#allocation0] sm:$0x3]
    %17 = vrot.lane.b32.xlu0 %v16, 112
    %v18 = vpop.permute.xlu0 %17
    %vm19 = vcmask 64512
    %s20 = scalar_lea.vmem %s1, 2
    %21 = vst.msk [vmem:[%s20] ss:$4 sm:$0x3] %vm19, %v18
    %v22 = vld [vmem:[#allocation0] sm:$0x3]
    %23 = vrot.lane.b32.xlu0 %v22, 104
    %v24 = vpop.permute.xlu0 %23
    %vm25 = vcmask 64512
    %s26 = scalar_lea.vmem %s1, 3
    %27 = vst.msk [vmem:[%s26] ss:$4 sm:$0x3] %vm25, %v24

// kernel: decoder_block_forward.3
$region0: #{decoder_block_forward.3}
  #allocation0 [shape = 'u32[]', space=smem, size = 0x4, offset = 0x4, fixed_abs, tag = 'smem constant byte address 0x4 - core index']
  #allocation1 [shape = 'u32[144,128]{1,0:T(1,128)}', space=vmem, size = 0x12000, scoped, tag = 'internal scratch']
  #allocation2 [shape = 'f32[16,401]{1,0:T(8,128)}', space=vmem, size = 0x8000, scoped, tag = 'scratch operand']
  %s0 = inlined_call_operand.vmem [shape: f32[2,16,256], index: 0, kind: input, shape index: {}]
  %s1 = inlined_call_operand.vmem [shape: bf16[4,144], index: 1, kind: input, shape index: {}]
  %s2 = inlined_call_operand.vmem [shape: f32[2,4,256], index: 2, kind: output, shape index: {0}]
  %s3 = inlined_call_operand.vmem [shape: f32[2,8,1], index: 3, kind: output, shape index: {1}]
  %4 = xla_tuple %s2, %s3
  %s5 = sld [smem:[#allocation0]]
  $region49: #{decoder_block_forward.3} parent=0
    _
  %s7 = ssub.s32 1, %s5
  %s8 = scalar_select 0, %s7, %s5
  loop: start=0, step=1, limit=4
  $region2: #{decoder_block_forward.3} parent=0 // loop_pre_header
    _
  $region3: #{decoder_block_forward.3} parent=0 // loop_header
    %s10 = sphi 0, %s14
    %p11 = scmp.ge.s32.totalorder %s10, 4
    %s20 = sphi 0, %s22
    %s23 = sphi 0, %s20
    %s24 = sphi 0, %s23
    %s40 = sphi 0, %s24
    %s44 = sphi 0, %s44
    %s46 = sphi 0, %s44
    %s47 = sphi 0, %s46
    %s61 = sphi 0, %s47
    %s67 = sphi 0, %s69
    %s70 = sphi 0, %s67
    %s71 = sphi 0, %s70
    %s87 = sphi 0, %s71
    %s93 = sphi 0, %s95
    %s96 = sphi 0, %s93
    %s97 = sphi 0, %s96
    %s113 = sphi 0, %s97
  $region4: #{decoder_block_forward.3} parent=0 // loop_header_branch
    %13 = sbr.rel (%p11) target = $region8
  $region5: #{decoder_block_forward.3} parent=0 // loop_body
    %s15 = ssub.s32 %s10, 1
    %s16 = ssub.s32 %s10, 2
    %s17 = sadd.s32 %s10, 1
    %s18 = ssub.s32 %s10, %s17
    %p19 = scmp.eq.s32.totalorder %s18, 0
    %s21 = sadd.s32 %s20, 1
    %s22 = scalar_select %p19, %s20, %s21
    %p25 = pneg %p19
    %p26 = scmp.eq.s32.totalorder %s10, 1
    %p27 = por %p25, %p26
    %p28 = scmp.ne.s32.totalorder %s20, %s23
    %p29 = scmp.eq.s32.totalorder %s10, 0
    %p30 = por %p28, %p29
    %p31 = scmp.ne.s32.totalorder %s20, %s23
    %p32 = scmp.eq.s32.totalorder %s15, 1
    %p33 = por %p31, %p32
    %p34 = scmp.ne.s32.totalorder %s23, %s24
    %p35 = scmp.eq.s32.totalorder %s15, 0
    %p36 = por %p34, %p35
    %p37 = scmp.ne.s32.totalorder %s23, %s24
    %p38 = scmp.eq.s32.totalorder %s16, 1
    %p39 = por %p37, %p38
    %p41 = scmp.ne.s32.totalorder %s24, %s40
    %p42 = scmp.eq.s32.totalorder %s16, 0
    %p43 = por %p41, %p42
    %s45 = sadd.s32 %s44, 1
    %p48 = scmp.eq.s32.totalorder %s10, 1
    %p49 = scmp.ne.s32.totalorder %s44, %s46
    %p50 = scmp.eq.s32.totalorder %s10, 0
    %p51 = por %p49, %p50
    %p52 = scmp.ne.s32.totalorder %s44, %s46
    %p53 = scmp.eq.s32.totalorder %s15, 1
    %p54 = por %p52, %p53
    %p55 = scmp.ne.s32.totalorder %s46, %s47
    %p56 = scmp.eq.s32.totalorder %s15, 0
    %p57 = por %p55, %p56
    %p58 = scmp.ne.s32.totalorder %s46, %s47
    %p59 = scmp.eq.s32.totalorder %s16, 1
    %p60 = por %p58, %p59
    %p62 = scmp.ne.s32.totalorder %s47, %s61
    %p63 = scmp.eq.s32.totalorder %s16, 0
    %p64 = por %p62, %p63
    %s65 = ssub.s32 %s10, %s17
    %p66 = scmp.eq.s32.totalorder %s65, 0
    %s68 = sadd.s32 %s67, 1
    %s69 = scalar_select %p66, %s67, %s68
    %p72 = pneg %p66
    %p73 = scmp.eq.s32.totalorder %s10, 1
    %p74 = por %p72, %p73
    %p75 = scmp.ne.s32.totalorder %s67, %s70
    %p76 = scmp.eq.s32.totalorder %s10, 0
    %p77 = por %p75, %p76
    %p78 = scmp.ne.s32.totalorder %s67, %s70
    %p79 = scmp.eq.s32.totalorder %s15, 1
    %p80 = por %p78, %p79
    %p81 = scmp.ne.s32.totalorder %s70, %s71
    %p82 = scmp.eq.s32.totalorder %s15, 0
    %p83 = por %p81, %p82
    %p84 = scmp.ne.s32.totalorder %s70, %s71
    %p85 = scmp.eq.s32.totalorder %s16, 1
    %p86 = por %p84, %p85
    %p88 = scmp.ne.s32.totalorder %s71, %s87
    %p89 = scmp.eq.s32.totalorder %s16, 0
    %p90 = por %p88, %p89
    %s91 = ssub.s32 %s10, %s17
    %p92 = scmp.eq.s32.totalorder %s91, 0
    %s94 = sadd.s32 %s93, 1
    %s95 = scalar_select %p92, %s93, %s94
    %p98 = pneg %p92
    %p99 = scmp.eq.s32.totalorder %s10, 1
    %p100 = por %p98, %p99
    %p101 = scmp.ne.s32.totalorder %s93, %s96
    %p102 = scmp.eq.s32.totalorder %s10, 0
    %p103 = por %p101, %p102
    %p104 = scmp.ne.s32.totalorder %s93, %s96
    %p105 = scmp.eq.s32.totalorder %s15, 1
    %p106 = por %p104, %p105
    %p107 = scmp.ne.s32.totalorder %s96, %s97
    %p108 = scmp.eq.s32.totalorder %s15, 0
    %p109 = por %p107, %p108
    %p110 = scmp.ne.s32.totalorder %s96, %s97
    %p111 = scmp.eq.s32.totalorder %s16, 1
    %p112 = por %p110, %p111
    %p114 = scmp.ne.s32.totalorder %s97, %s113
    %p115 = scmp.eq.s32.totalorder %s16, 0
    %p116 = por %p114, %p115
    %p117 = scmp.le.s32.totalorder 1, %s10
    %p118 = scmp.lt.s32.totalorder %s10, 3
    %p119 = pnand %p117, %p118
    %p120 = pneg %p119
    // Predicated region
    $region9: #{decoder_block_forward.3} parent=5 // pred_check
      _
    $region10: #{decoder_block_forward.3} parent=5 // pred_check_branch
      %122 = sbr.rel (%p119) target = $region12
    $region11: #{decoder_block_forward.3} parent=5 // pred_region
      %s123 = ssub.s32 %s10, 1
      // Predicated region
      $region13: #{decoder_block_forward.3} parent=11 // pred_check
        %p124 = pneg %p57
      $region14: #{decoder_block_forward.3} parent=11 // pred_check_branch
        %126 = sbr.rel (%p124) target = $region16
      $region15: #{decoder_block_forward.3} parent=11 // pred_region
        _
      $region16: #{decoder_block_forward.3} parent=11 // pred_fallthru
        _
    $region12: #{decoder_block_forward.3} parent=5 // pred_fallthru
      _
    %p127 = scmp.lt.s32.totalorder %s10, 2
    // Predicated region
    $region17: #{decoder_block_forward.3} parent=5 // pred_check
      %p128 = pneg %p127
    $region18: #{decoder_block_forward.3} parent=5 // pred_check_branch
      %130 = sbr.rel (%p128) target = $region20
    $region19: #{decoder_block_forward.3} parent=5 // pred_region
      // Predicated region
      $region21: #{decoder_block_forward.3} parent=19 // pred_check
        %p131 = pneg %p30
      $region22: #{decoder_block_forward.3} parent=19 // pred_check_branch
        %133 = sbr.rel (%p131) target = $region24
      $region23: #{decoder_block_forward.3} parent=19 // pred_region
        %p134 = scmp.lt.s32.totalorder %s10, 1
        %s135 = scalar_select %p134, %s10, 1
        %s136 = smul.addr %s135, 4
        %s137 = smul.addr %s136, 8
        %s138 = scalar_lea.vmem %s0, %s137
      $region24: #{decoder_block_forward.3} parent=19 // pred_fallthru
        _
    $region20: #{decoder_block_forward.3} parent=5 // pred_fallthru
      _
    %p139 = scmp.le.s32.totalorder 1, %s10
    %p140 = scmp.lt.s32.totalorder %s10, 3
    %p141 = pnand %p139, %p140
    %p142 = pneg %p141
    // Predicated region
    $region25: #{decoder_block_forward.3} parent=5 // pred_check
      _
    $region26: #{decoder_block_forward.3} parent=5 // pred_check_branch
      %144 = sbr.rel (%p141) target = $region28
    $region27: #{decoder_block_forward.3} parent=5 // pred_region
      %s145 = ssub.s32 %s10, 1
      %p146 = scmp.lt.s32.totalorder %s15, 1
      %s147 = scalar_select %p146, %s15, 1
      %s148 = smul.addr %s147, 4
      %s149 = smul.addr %s148, 8
      %s150 = scalar_lea.vmem %s0, %s149
      %p151 = pneg %p36
      %p152 = pneg %p33
      %p153 = pneg %p57
      %p154 = pneg %p54
      %p155 = pneg %p83
      %p156 = pneg %p80
      %p157 = scmp.lt.s32.totalorder %s15, 1
      %s158 = scalar_select %p157, %s15, 1
      %s159 = smul.addr %s158, 2
      %s160 = smul.addr %s159, 4
      %s161 = scalar_lea.vmem %s2, %s160
      %p162 = pneg %p109
      %p163 = pneg %p106
      %p164 = scmp.lt.s32.totalorder %s15, 1
      %s165 = scalar_select %p164, %s15, 1
      %s166 = smul.addr %s165, 8
      %s167 = scalar_lea.vmem %s3, %s166
      %p168 = scmp.lt.s32.totalorder %s15, 1
      %s169 = scalar_select %p168, %s15, 1
      %s170 = smul.addr %s169, 4
      %s171 = smul.addr %s170, 8
      %s172 = scalar_lea.vmem %s0, %s171
      %p173 = scmp.lt.s32.totalorder %s15, 1
      %s174 = scalar_select %p173, %s15, 1
      %s175 = smul.addr %s174, 2
      %s176 = smul.addr %s175, 4
      %s177 = scalar_lea.vmem %s2, %s176
      %p178 = scmp.lt.s32.totalorder %s15, 1
      %s179 = scalar_select %p178, %s15, 1
      %s180 = smul.addr %s179, 8
      %s181 = scalar_lea.vmem %s3, %s180
      %v183 = vld [vmem:[%s172] sm:$0xff]
      %v184 = vld [vmem:[%s172 + $0x8] sm:$0xff]
      %v185 = vld [vmem:[%s172 + $0x10] sm:$0xff]
      %v186 = vld [vmem:[%s172 + $0x18] sm:$0xff]
      %187 = vst [vmem:[#allocation2] sm:$0xff] 0.0
      %188 = vst [vmem:[#allocation2 + $0x8] sm:$0xff] 0.0
      %189 = vst [vmem:[#allocation2 + $0x10] sm:$0xff] 0.0
      %vm190 = vcmask 138240
      %191 = vst.msk [vmem:[#allocation2 + $0x18] sm:$0xff] %vm190, 0.0
      %192 = vst [vmem:[#allocation2 + $0x20] sm:$0xff] 0.0
      %193 = vst [vmem:[#allocation2 + $0x28] sm:$0xff] 0.0
      %194 = vst [vmem:[#allocation2 + $0x30] sm:$0xff] 0.0
      %195 = vst.msk [vmem:[#allocation2 + $0x38] sm:$0xff] %vm190, 0.0
      %196 = vst [vmem:[#allocation2 + $0x8] sm:$0xff] %v183
      %197 = vst [vmem:[#allocation2 + $0x10] sm:$0xff] %v184
      %198 = vst [vmem:[#allocation2 + $0x28] sm:$0xff] %v185
      %199 = vst [vmem:[#allocation2 + $0x30] sm:$0xff] %v186
      %v200 = vlaneseq
      %v201 = vand.u32 %v200, 127
      %v202 = vadd.s32 %v201, 128
      %vm203 = vcmp.lt.s32.totalorder %v201, 0
      %v204 = vsub.s32 0, %v201
      %v205 = vsel %vm203, %v204, %v201
      %v206 = vshrl.u32 %v205, 4
      %v207 = vand.u32 %v205, 15
      %v208 = vsub.s32 0, %v207
      %v209 = vsel %vm203, %v208, %v207
      %vm210 = vcmp.lt.s32.totalorder %v202, 0
      %v211 = vsub.s32 0, %v202
      %v212 = vsel %vm210, %v211, %v202
      %v213 = vshrl.u32 %v212, 4
      %v214 = vand.u32 %v212, 15
      %v215 = vsub.s32 0, %v214
      %v216 = vsel %vm210, %v215, %v214
      %vm217 = vcmp.ne.s32.totalorder %v209, 0
      %vm218 = vcmp.ne.s32.totalorder %v216, 0
      %vm219 = vcmp.lt.s32.totalorder %v209, 0
      %vm220 = vcmp.lt.s32.totalorder %v216, 0
      %vm221 = vmand %vm219, %vm217
      %vm222 = vmand %vm220, %vm218
      %v223 = vadd.s32 %v209, 16
      %v224 = vadd.s32 %v216, 16
      %v225 = vsel %vm221, %v223, %v209
      %v226 = vsel %vm222, %v224, %v216
      %v227 = vld [vmem:[#allocation2] sm:$0xff]
      %v228 = vld [vmem:[#allocation2 + $0x8] sm:$0xff]
      %v229 = vld [vmem:[#allocation2 + $0x10] sm:$0xff]
      %v230 = vld [vmem:[#allocation2 + $0x20] sm:$0xff]
      %v231 = vld [vmem:[#allocation2 + $0x28] sm:$0xff]
      %v232 = vld [vmem:[#allocation2 + $0x30] sm:$0xff]
      %v233 = vadd.s32 %v225, 4294967295
      %v234 = vadd.s32 %v226, 4294967295
      %vm235 = vcmp.ge.s32.totalorder %v233, 0
      %vm236 = vcmp.ge.s32.totalorder %v234, 0
      %vm237 = vcmp.lt.s32.totalorder %v233, 16
      %vm238 = vcmp.lt.s32.totalorder %v234, 16
      %vm239 = vmand %vm235, %vm237
      %vm240 = vmand %vm236, %vm238
      %v241 = vsel %vm239, 1, 0
      %v242 = vsel %vm240, 1, 0
      %vm243 = vcmp.eq.s32.totalorder %v241, 1
      %vm244 = vcmp.eq.s32.totalorder %v242, 1
      %251 = vrot.lane.b32.xlu0 %v227, 17
      %v252 = vpop.permute.xlu0 %251
      %253 = vrot.lane.b32.xlu0 %v228, 17
      %v254 = vpop.permute.xlu0 %253
      %255 = vrot.lane.b32.xlu0 %v229, 17
      %v256 = vpop.permute.xlu0 %255
      %257 = vrot.lane.b32.xlu0 %v230, 17
      %v258 = vpop.permute.xlu0 %257
      %259 = vrot.lane.b32.xlu0 %v231, 17
      %v260 = vpop.permute.xlu0 %259
      %261 = vrot.lane.b32.xlu0 %v232, 17
      %v262 = vpop.permute.xlu0 %261
      %v263 = vsel %vm190, %v252, %v254
      %v264 = vsel %vm190, %v254, %v256
      %v265 = vsel %vm190, %v258, %v260
      %v266 = vsel %vm190, %v260, %v262
      %v271 = vsel %vm243, %v263, 0.0
      %v272 = vsel %vm244, %v264, 0.0
      %v273 = vsel %vm243, %v265, 0.0
      %v274 = vsel %vm244, %v266, 0.0
      %v275 = vpack.c.bf16 %v273, %v271
      %v276 = vpack.c.bf16 %v274, %v272
      %v277 = vpack.c.bf16 %v230, %v227
      %v278 = vpack.c.bf16 %v231, %v228
      %v279 = vpack.c.bf16 %v232, %v229
      %v280 = vadd.s32 %v225, 1
      %v281 = vadd.s32 %v226, 1
      %vm282 = vcmp.ge.s32.totalorder %v280, 0
      %vm283 = vcmp.ge.s32.totalorder %v281, 0
      %vm284 = vcmp.lt.s32.totalorder %v280, 16
      %vm285 = vcmp.lt.s32.totalorder %v281, 16
      %vm286 = vmand %vm282, %vm284
      %vm287 = vmand %vm283, %vm285
      %v288 = vsel %vm286, 1, 0
      %v289 = vsel %vm287, 1, 0
      %vm290 = vcmp.eq.s32.totalorder %v288, 1
      %vm291 = vcmp.eq.s32.totalorder %v289, 1
      %292 = vrot.lane.b32.xlu0 %v227, 15
      %v293 = vpop.permute.xlu0 %292
      %294 = vrot.lane.b32.xlu0 %v228, 15
      %v295 = vpop.permute.xlu0 %294
      %296 = vrot.lane.b32.xlu0 %v229, 15
      %v297 = vpop.permute.xlu0 %296
      %298 = vrot.lane.b32.xlu0 %v230, 15
      %v299 = vpop.permute.xlu0 %298
      %300 = vrot.lane.b32.xlu0 %v231, 15
      %v301 = vpop.permute.xlu0 %300
      %302 = vrot.lane.b32.xlu0 %v232, 15
      %v303 = vpop.permute.xlu0 %302
      %vm304 = vcmask 121856
      %v305 = vsel %vm304, %v293, %v295
      %v306 = vsel %vm304, %v295, %v297
      %v307 = vsel %vm304, %v299, %v301
      %v308 = vsel %vm304, %v301, %v303
      %v313 = vsel %vm290, %v305, 0.0
      %v314 = vsel %vm291, %v306, 0.0
      %v315 = vsel %vm290, %v307, 0.0
      %v316 = vsel %vm291, %v308, 0.0
      %v317 = vpack.c.bf16 %v315, %v313
      %v318 = vpack.c.bf16 %v316, %v314
      %319 = vrot.lane.b32.xlu0 %v227, 1
      %v320 = vpop.permute.xlu0 %319
      %321 = vrot.lane.b32.xlu0 %v228, 1
      %v322 = vpop.permute.xlu0 %321
      %323 = vrot.lane.b32.xlu0 %v229, 1
      %v324 = vpop.permute.xlu0 %323
      %325 = vrot.lane.b32.xlu0 %v230, 1
      %v326 = vpop.permute.xlu0 %325
      %327 = vrot.lane.b32.xlu0 %v231, 1
      %v328 = vpop.permute.xlu0 %327
      %329 = vrot.lane.b32.xlu0 %v232, 1
      %v330 = vpop.permute.xlu0 %329
      %vm331 = vcmask 7168
      %v332 = vsel %vm331, %v320, %v322
      %v333 = vsel %vm331, %v322, %v324
      %v334 = vsel %vm331, %v326, %v328
      %v335 = vsel %vm331, %v328, %v330
      %v340 = vsel %vm243, %v332, 0.0
      %v341 = vsel %vm244, %v333, 0.0
      %v342 = vsel %vm243, %v334, 0.0
      %v343 = vsel %vm244, %v335, 0.0
      %v344 = vpack.c.bf16 %v342, %v340
      %v345 = vpack.c.bf16 %v343, %v341
      %v346 = vld [vmem:[#allocation2 + $0x18] sm:$0xff]
      %v347 = vld [vmem:[#allocation2 + $0x38] sm:$0xff]
      %350 = vrot.lane.b32.xlu0 %v228, 127
      %v351 = vpop.permute.xlu0 %350
      %352 = vrot.lane.b32.xlu0 %v229, 127
      %v353 = vpop.permute.xlu0 %352
      %354 = vrot.lane.b32.xlu0 %v346, 127
      %v355 = vpop.permute.xlu0 %354
      %356 = vrot.lane.b32.xlu0 %v231, 127
      %v357 = vpop.permute.xlu0 %356
      %358 = vrot.lane.b32.xlu0 %v232, 127
      %v359 = vpop.permute.xlu0 %358
      %360 = vrot.lane.b32.xlu0 %v347, 127
      %v361 = vpop.permute.xlu0 %360
      %vm362 = vcmask 1039360
      %v363 = vsel %vm362, %v351, %v353
      %v364 = vsel %vm362, %v353, %v355
      %v365 = vsel %vm362, %v357, %v359
      %v366 = vsel %vm362, %v359, %v361
      %v371 = vsel %vm290, %v363, 0.0
      %v372 = vsel %vm291, %v364, 0.0
      %v373 = vsel %vm290, %v365, 0.0
      %v374 = vsel %vm291, %v366, 0.0
      %v375 = vpack.c.bf16 %v373, %v371
      %v376 = vpack.c.bf16 %v374, %v372
      %377 = vrot.lane.b32.xlu0 %v228, 113
      %v378 = vpop.permute.xlu0 %377
      %379 = vrot.lane.b32.xlu0 %v229, 113
      %v380 = vpop.permute.xlu0 %379
      %381 = vrot.lane.b32.xlu0 %v346, 113
      %v382 = vpop.permute.xlu0 %381
      %383 = vrot.lane.b32.xlu0 %v231, 113
      %v384 = vpop.permute.xlu0 %383
      %385 = vrot.lane.b32.xlu0 %v232, 113
      %v386 = vpop.permute.xlu0 %385
      %387 = vrot.lane.b32.xlu0 %v347, 113
      %v388 = vpop.permute.xlu0 %387
      %vm389 = vcmask 924672
      %v390 = vsel %vm389, %v378, %v380
      %v391 = vsel %vm389, %v380, %v382
      %v392 = vsel %vm389, %v384, %v386
      %v393 = vsel %vm389, %v386, %v388
      %v398 = vsel %vm243, %v390, 0.0
      %v399 = vsel %vm244, %v391, 0.0
      %v400 = vsel %vm243, %v392, 0.0
      %v401 = vsel %vm244, %v393, 0.0
      %v402 = vpack.c.bf16 %v400, %v398
      %v403 = vpack.c.bf16 %v401, %v399
      %v404 = vpack.c.bf16 %v347, %v346
      %405 = vrot.lane.b32.xlu0 %v228, 111
      %v406 = vpop.permute.xlu0 %405
      %407 = vrot.lane.b32.xlu0 %v229, 111
      %v408 = vpop.permute.xlu0 %407
      %409 = vrot.lane.b32.xlu0 %v346, 111
      %v410 = vpop.permute.xlu0 %409
      %411 = vrot.lane.b32.xlu0 %v231, 111
      %v412 = vpop.permute.xlu0 %411
      %413 = vrot.lane.b32.xlu0 %v232, 111
      %v414 = vpop.permute.xlu0 %413
      %415 = vrot.lane.b32.xlu0 %v347, 111
      %v416 = vpop.permute.xlu0 %415
      %vm417 = vcmask 908288
      %v418 = vsel %vm417, %v406, %v408
      %v419 = vsel %vm417, %v408, %v410
      %v420 = vsel %vm417, %v412, %v414
      %v421 = vsel %vm417, %v414, %v416
      %v426 = vsel %vm290, %v418, 0.0
      %v427 = vsel %vm291, %v419, 0.0
      %v428 = vsel %vm290, %v420, 0.0
      %v429 = vsel %vm291, %v421, 0.0
      %v430 = vpack.c.bf16 %v428, %v426
      %v431 = vpack.c.bf16 %v429, %v427
      %435 = vrot.lane.b32.xlu0 %v277, 16
      %v436 = vpop.permute.xlu0 %435
      %437 = vrot.lane.b32.xlu0 %v278, 16
      %v438 = vpop.permute.xlu0 %437
      %439 = vrot.lane.b32.xlu0 %v279, 16
      %v440 = vpop.permute.xlu0 %439
      %vm441 = vcmask 130048
      %v442 = vsel %vm441, %v436, %v438
      %v443 = vsel %vm441, %v438, %v440
      %447 = vrot.lane.b32.xlu0 %v278, 112
      %v448 = vpop.permute.xlu0 %447
      %449 = vrot.lane.b32.xlu0 %v279, 112
      %v450 = vpop.permute.xlu0 %449
      %451 = vrot.lane.b32.xlu0 %v404, 112
      %v452 = vpop.permute.xlu0 %451
      %vm453 = vcmask 916480
      %v454 = vsel %vm453, %v448, %v450
      %v455 = vsel %vm453, %v450, %v452
      %v458 = vld [vmem:[%s1] sm:$0xf]
      %v461 = vunpack.c.l.s4 1983009808
      %v462 = vunpack.c.0.s8 %v461
      %v463 = vlaneseq
      %v464 = vshrl.u32 %v463, 7
      %v465 = vsub.s32 %v462, %v464
      %v466 = vrot.slane %v458, %v465
      %v467 = vcombine.high %v466, %v466
      %vm469 = vcmask 130048
      %v471 = vsel %vm469, %v467, 0
      %473 = vmatprep.subr.bf16.mxu0 %v455
      %474 = vmatpush1.bf16.msra.mxu0 %v454
      %475 = vmatprep.subr.bf16.mxu0 %v403
      %476 = vmatpush1.bf16.msra.mxu0 %v402
      %477 = vmatprep.subr.bf16.mxu0 %v376
      %478 = vmatpush1.bf16.msra.mxu0 %v375
      %479 = vmatprep.subr.bf16.mxu0 %v279
      %480 = vmatpush1.bf16.msra.mxu0 %v278
      %481 = vmatprep.subr.bf16.mxu0 %v345
      %482 = vmatpush1.bf16.msra.mxu0 %v344
      %483 = vmatprep.subr.bf16.mxu0 %v318
      %484 = vmatpush1.bf16.msra.mxu0 %v317
      %485 = vmatprep.subr.bf16.mxu0 %v443
      %486 = vmatpush1.bf16.msra.mxu0 %v442
      %487 = vmatprep.subr.bf16.mxu0 %v276
      %488 = vmatpush1.bf16.msra.mxu0 %v275
      %489 = vmatprep.subr.bf16.mxu0 0
      %490 = vmatpush2.bf16.msra.mxu0 0
      %491 = vmatprep.subr.bf16.mxu0 0
      %492 = vmatpush2.bf16.msra.mxu0 0
      %493 = vmatprep.subr.bf16.mxu0 0
      %494 = vmatpush2.bf16.msra.mxu0 0
      %495 = vmatprep.subr.bf16.mxu0 0
      %496 = vmatpush2.bf16.msra.mxu0 0
      %497 = vmatprep.subr.bf16.mxu0 0
      %498 = vmatpush2.bf16.msra.mxu0 0
      %499 = vmatprep.subr.bf16.mxu0 0
      %500 = vmatpush2.bf16.msra.mxu0 0
      %501 = vmatprep.subr.bf16.mxu0 0
      %502 = vmatpush2.bf16.msra.mxu0 0
      %503 = vmatprep.subr.bf16.mxu0 %v431
      %504 = vmatpush2.bf16.msra.mxu0 %v430
      %505 = vmatprep.mubr.bf16.mxu0 %v471
      %506 = vmatmul.mubr.bf16.gmra.mxu0 %v466
      %v507 = vpop.f32.mrf.mxu0
      %v508 = vadd.f32 0.0, %v507
      %v509 = vpop.f32.mrf.mxu0
      %v510 = vadd.f32 0.0, %v509
      %v511 = vpop.f32.mrf.mxu0
      %v512 = vpop.f32.mrf.mxu0
      %513 = vdwg.mxu0
      %v516 = vcombine.low %v508, %v510
      %518 = vst [vmem:[%s177] sm:$0xff] %v516
      %vm519 = vcmask 1043456
      %v520 = vsel %vm519, %v508, 0.0
      %v521 = vsel %vm519, %v510, 0.0
      %v522 = vadd.f32 %v520, %v521
      %523 = vadd.xlane.f32.xlu0 %v522
      %v524 = vpop.xlane.xlu0 %523
      %vm525 = vcmask 3072
      %526 = vst.msk [vmem:[%s181] sm:$0xf] %vm525, %v524
      %v527 = vmul.f32 %v508, %v508
      %v528 = vmul.f32 %v510, %v510
      %v529 = vsel %vm519, %v527, 0.0
      %v530 = vsel %vm519, %v528, 0.0
      %v531 = vadd.f32 %v529, %v530
      %532 = vadd.xlane.f32.xlu0 %v531
      %v533 = vpop.xlane.xlu0 %532
      %534 = vst.msk [vmem:[%s181 + $0x4] sm:$0xf] %vm525, %v533
      %p535 = scmp.lt.s32.totalorder %s15, 1
      %s536 = scalar_select %p535, %s15, 1
      %s537 = smul.addr %s536, 2
      %s538 = smul.addr %s537, 4
      %s539 = scalar_lea.vmem %s2, %s538
      %p540 = scmp.lt.s32.totalorder %s15, 1
      %s541 = scalar_select %p540, %s15, 1
      %s542 = smul.addr %s541, 8
      %s543 = scalar_lea.vmem %s3, %s542
      // Predicated region
      $region29: #{decoder_block_forward.3} parent=27 // pred_check
        %p544 = pneg %p80
      $region30: #{decoder_block_forward.3} parent=27 // pred_check_branch
        %546 = sbr.rel (%p544) target = $region32
      $region31: #{decoder_block_forward.3} parent=27 // pred_region
        _
      $region32: #{decoder_block_forward.3} parent=27 // pred_fallthru
        _
      // Predicated region
      $region33: #{decoder_block_forward.3} parent=27 // pred_check
        %p547 = pneg %p106
      $region34: #{decoder_block_forward.3} parent=27 // pred_check_branch
        %549 = sbr.rel (%p547) target = $region36
      $region35: #{decoder_block_forward.3} parent=27 // pred_region
        _
      $region36: #{decoder_block_forward.3} parent=27 // pred_fallthru
        _
    $region28: #{decoder_block_forward.3} parent=5 // pred_fallthru
      _
    %p550 = scmp.le.s32.totalorder 2, %s10
    // Predicated region
    $region37: #{decoder_block_forward.3} parent=5 // pred_check
      %p551 = pneg %p550
    $region38: #{decoder_block_forward.3} parent=5 // pred_check_branch
      %553 = sbr.rel (%p551) target = $region40
    $region39: #{decoder_block_forward.3} parent=5 // pred_region
      %s554 = ssub.s32 %s10, 2
      // Predicated region
      $region41: #{decoder_block_forward.3} parent=39 // pred_check
        %p555 = pneg %p86
      $region42: #{decoder_block_forward.3} parent=39 // pred_check_branch
        %557 = sbr.rel (%p555) target = $region44
      $region43: #{decoder_block_forward.3} parent=39 // pred_region
        %p558 = scmp.lt.s32.totalorder %s16, 1
        %s559 = scalar_select %p558, %s16, 1
        %s560 = smul.addr %s559, 2
        %s561 = smul.addr %s560, 4
        %s562 = scalar_lea.vmem %s2, %s561
      $region44: #{decoder_block_forward.3} parent=39 // pred_fallthru
        _
      // Predicated region
      $region45: #{decoder_block_forward.3} parent=39 // pred_check
        %p563 = pneg %p112
      $region46: #{decoder_block_forward.3} parent=39 // pred_check_branch
        %565 = sbr.rel (%p563) target = $region48
      $region47: #{decoder_block_forward.3} parent=39 // pred_region
        %p566 = scmp.lt.s32.totalorder %s16, 1
        %s567 = scalar_select %p566, %s16, 1
        %s568 = smul.addr %s567, 8
        %s569 = scalar_lea.vmem %s3, %s568
      $region48: #{decoder_block_forward.3} parent=39 // pred_fallthru
        _
    $region40: #{decoder_block_forward.3} parent=5 // pred_fallthru
      _
  $region6: #{decoder_block_forward.3} parent=0 // loop_footer
    %s14 = sadd.s32 1, %s10
  $region7: #{decoder_block_forward.3} parent=0 // loop_footer_branch
    %9 = sbr.rel target = $region3
  $region8: #{decoder_block_forward.3} parent=0 // loop_exit
    _

// kernel: decoder_block_forward.4
$region0: #{decoder_block_forward.4}
  #allocation0 [shape = 'u32[]', space=smem, size = 0x4, offset = 0x4, fixed_abs, tag = 'smem constant byte address 0x4 - core index']
  #allocation1 [shape = 'u32[144,128]{1,0:T(1,128)}', space=vmem, size = 0x12000, scoped, tag = 'internal scratch']
  #allocation2 [shape = 'f32[8,401]{1,0:T(8,128)}', space=vmem, size = 0x4000, scoped, tag = 'scratch operand']
  %s0 = inlined_call_operand.vmem [shape: f32[2,4,256], index: 0, kind: input, shape index: {}]
  %s1 = inlined_call_operand.vmem [shape: f32[4,1], index: 1, kind: input, shape index: {}]
  %s2 = inlined_call_operand.vmem [shape: f32[4,1], index: 2, kind: input, shape index: {}]
  %s3 = inlined_call_operand.vmem [shape: bf16[16,32], index: 3, kind: input, shape index: {}]
  %s4 = inlined_call_operand.vmem [shape: f32[2,16,256], index: 4, kind: output, shape index: {0}]
  %s5 = inlined_call_operand.vmem [shape: f32[2,32,1], index: 5, kind: output, shape index: {1}]
  %6 = xla_tuple %s4, %s5
  %s7 = sld [smem:[#allocation0]]
  $region57: #{decoder_block_forward.4} parent=0
    _
  %s9 = ssub.s32 1, %s7
  %s10 = scalar_select 0, %s9, %s7
  loop: start=0, step=1, limit=4
  $region2: #{decoder_block_forward.4} parent=0 // loop_pre_header
    _
  $region3: #{decoder_block_forward.4} parent=0 // loop_header
    %s12 = sphi 0, %s16
    %p13 = scmp.ge.s32.totalorder %s12, 4
    %s22 = sphi 0, %s24
    %s25 = sphi 0, %s22
    %s26 = sphi 0, %s25
    %s42 = sphi 0, %s26
    %s46 = sphi 0, %s46
    %s48 = sphi 0, %s46
    %s49 = sphi 0, %s48
    %s63 = sphi 0, %s49
    %s67 = sphi 0, %s67
    %s69 = sphi 0, %s67
    %s70 = sphi 0, %s69
    %s84 = sphi 0, %s70
    %s88 = sphi 0, %s88
    %s90 = sphi 0, %s88
    %s91 = sphi 0, %s90
    %s105 = sphi 0, %s91
    %s111 = sphi 0, %s113
    %s114 = sphi 0, %s111
    %s115 = sphi 0, %s114
    %s131 = sphi 0, %s115
    %s137 = sphi 0, %s139
    %s140 = sphi 0, %s137
    %s141 = sphi 0, %s140
    %s157 = sphi 0, %s141
  $region4: #{decoder_block_forward.4} parent=0 // loop_header_branch
    %15 = sbr.rel (%p13) target = $region8
  $region5: #{decoder_block_forward.4} parent=0 // loop_body
    %s17 = ssub.s32 %s12, 1
    %s18 = ssub.s32 %s12, 2
    %s19 = sadd.s32 %s12, 1
    %s20 = ssub.s32 %s12, %s19
    %p21 = scmp.eq.s32.totalorder %s20, 0
    %s23 = sadd.s32 %s22, 1
    %s24 = scalar_select %p21, %s22, %s23
    %p27 = pneg %p21
    %p28 = scmp.eq.s32.totalorder %s12, 1
    %p29 = por %p27, %p28
    %p30 = scmp.ne.s32.totalorder %s22, %s25
    %p31 = scmp.eq.s32.totalorder %s12, 0
    %p32 = por %p30, %p31
    %p33 = scmp.ne.s32.totalorder %s22, %s25
    %p34 = scmp.eq.s32.totalorder %s17, 1
    %p35 = por %p33, %p34
    %p36 = scmp.ne.s32.totalorder %s25, %s26
    %p37 = scmp.eq.s32.totalorder %s17, 0
    %p38 = por %p36, %p37
    %p39 = scmp.ne.s32.totalorder %s25, %s26
    %p40 = scmp.eq.s32.totalorder %s18, 1
    %p41 = por %p39, %p40
    %p43 = scmp.ne.s32.totalorder %s26, %s42
    %p44 = scmp.eq.s32.totalorder %s18, 0
    %p45 = por %p43, %p44
    %s47 = sadd.s32 %s46, 1
    %p50 = scmp.eq.s32.totalorder %s12, 1
    %p51 = scmp.ne.s32.totalorder %s46, %s48
    %p52 = scmp.eq.s32.totalorder %s12, 0
    %p53 = por %p51, %p52
    %p54 = scmp.ne.s32.totalorder %s46, %s48
    %p55 = scmp.eq.s32.totalorder %s17, 1
    %p56 = por %p54, %p55
    %p57 = scmp.ne.s32.totalorder %s48, %s49
    %p58 = scmp.eq.s32.totalorder %s17, 0
    %p59 = por %p57, %p58
    %p60 = scmp.ne.s32.totalorder %s48, %s49
    %p61 = scmp.eq.s32.totalorder %s18, 1
    %p62 = por %p60, %p61
    %p64 = scmp.ne.s32.totalorder %s49, %s63
    %p65 = scmp.eq.s32.totalorder %s18, 0
    %p66 = por %p64, %p65
    %s68 = sadd.s32 %s67, 1
    %p71 = scmp.eq.s32.totalorder %s12, 1
    %p72 = scmp.ne.s32.totalorder %s67, %s69
    %p73 = scmp.eq.s32.totalorder %s12, 0
    %p74 = por %p72, %p73
    %p75 = scmp.ne.s32.totalorder %s67, %s69
    %p76 = scmp.eq.s32.totalorder %s17, 1
    %p77 = por %p75, %p76
    %p78 = scmp.ne.s32.totalorder %s69, %s70
    %p79 = scmp.eq.s32.totalorder %s17, 0
    %p80 = por %p78, %p79
    %p81 = scmp.ne.s32.totalorder %s69, %s70
    %p82 = scmp.eq.s32.totalorder %s18, 1
    %p83 = por %p81, %p82
    %p85 = scmp.ne.s32.totalorder %s70, %s84
    %p86 = scmp.eq.s32.totalorder %s18, 0
    %p87 = por %p85, %p86
    %s89 = sadd.s32 %s88, 1
    %p92 = scmp.eq.s32.totalorder %s12, 1
    %p93 = scmp.ne.s32.totalorder %s88, %s90
    %p94 = scmp.eq.s32.totalorder %s12, 0
    %p95 = por %p93, %p94
    %p96 = scmp.ne.s32.totalorder %s88, %s90
    %p97 = scmp.eq.s32.totalorder %s17, 1
    %p98 = por %p96, %p97
    %p99 = scmp.ne.s32.totalorder %s90, %s91
    %p100 = scmp.eq.s32.totalorder %s17, 0
    %p101 = por %p99, %p100
    %p102 = scmp.ne.s32.totalorder %s90, %s91
    %p103 = scmp.eq.s32.totalorder %s18, 1
    %p104 = por %p102, %p103
    %p106 = scmp.ne.s32.totalorder %s91, %s105
    %p107 = scmp.eq.s32.totalorder %s18, 0
    %p108 = por %p106, %p107
    %s109 = ssub.s32 %s12, %s19
    %p110 = scmp.eq.s32.totalorder %s109, 0
    %s112 = sadd.s32 %s111, 1
    %s113 = scalar_select %p110, %s111, %s112
    %p116 = pneg %p110
    %p117 = scmp.eq.s32.totalorder %s12, 1
    %p118 = por %p116, %p117
    %p119 = scmp.ne.s32.totalorder %s111, %s114
    %p120 = scmp.eq.s32.totalorder %s12, 0
    %p121 = por %p119, %p120
    %p122 = scmp.ne.s32.totalorder %s111, %s114
    %p123 = scmp.eq.s32.totalorder %s17, 1
    %p124 = por %p122, %p123
    %p125 = scmp.ne.s32.totalorder %s114, %s115
    %p126 = scmp.eq.s32.totalorder %s17, 0
    %p127 = por %p125, %p126
    %p128 = scmp.ne.s32.totalorder %s114, %s115
    %p129 = scmp.eq.s32.totalorder %s18, 1
    %p130 = por %p128, %p129
    %p132 = scmp.ne.s32.totalorder %s115, %s131
    %p133 = scmp.eq.s32.totalorder %s18, 0
    %p134 = por %p132, %p133
    %s135 = ssub.s32 %s12, %s19
    %p136 = scmp.eq.s32.totalorder %s135, 0
    %s138 = sadd.s32 %s137, 1
    %s139 = scalar_select %p136, %s137, %s138
    %p142 = pneg %p136
    %p143 = scmp.eq.s32.totalorder %s12, 1
    %p144 = por %p142, %p143
    %p145 = scmp.ne.s32.totalorder %s137, %s140
    %p146 = scmp.eq.s32.totalorder %s12, 0
    %p147 = por %p145, %p146
    %p148 = scmp.ne.s32.totalorder %s137, %s140
    %p149 = scmp.eq.s32.totalorder %s17, 1
    %p150 = por %p148, %p149
    %p151 = scmp.ne.s32.totalorder %s140, %s141
    %p152 = scmp.eq.s32.totalorder %s17, 0
    %p153 = por %p151, %p152
    %p154 = scmp.ne.s32.totalorder %s140, %s141
    %p155 = scmp.eq.s32.totalorder %s18, 1
    %p156 = por %p154, %p155
    %p158 = scmp.ne.s32.totalorder %s141, %s157
    %p159 = scmp.eq.s32.totalorder %s18, 0
    %p160 = por %p158, %p159
    %p161 = scmp.le.s32.totalorder 1, %s12
    %p162 = scmp.lt.s32.totalorder %s12, 3
    %p163 = pnand %p161, %p162
    %p164 = pneg %p163
    // Predicated region
    $region9: #{decoder_block_forward.4} parent=5 // pred_check
      _
    $region10: #{decoder_block_forward.4} parent=5 // pred_check_branch
      %166 = sbr.rel (%p163) target = $region12
    $region11: #{decoder_block_forward.4} parent=5 // pred_region
      %s167 = ssub.s32 %s12, 1
      // Predicated region
      $region13: #{decoder_block_forward.4} parent=11 // pred_check
        %p168 = pneg %p59
      $region14: #{decoder_block_forward.4} parent=11 // pred_check_branch
        %170 = sbr.rel (%p168) target = $region16
      $region15: #{decoder_block_forward.4} parent=11 // pred_region
        _
      $region16: #{decoder_block_forward.4} parent=11 // pred_fallthru
        _
      // Predicated region
      $region17: #{decoder_block_forward.4} parent=11 // pred_check
        %p171 = pneg %p80
      $region18: #{decoder_block_forward.4} parent=11 // pred_check_branch
        %173 = sbr.rel (%p171) target = $region20
      $region19: #{decoder_block_forward.4} parent=11 // pred_region
        _
      $region20: #{decoder_block_forward.4} parent=11 // pred_fallthru
        _
      // Predicated region
      $region21: #{decoder_block_forward.4} parent=11 // pred_check
        %p174 = pneg %p101
      $region22: #{decoder_block_forward.4} parent=11 // pred_check_branch
        %176 = sbr.rel (%p174) target = $region24
      $region23: #{decoder_block_forward.4} parent=11 // pred_region
        _
      $region24: #{decoder_block_forward.4} parent=11 // pred_fallthru
        _
    $region12: #{decoder_block_forward.4} parent=5 // pred_fallthru
      _
    %p177 = scmp.lt.s32.totalorder %s12, 2
    // Predicated region
    $region25: #{decoder_block_forward.4} parent=5 // pred_check
      %p178 = pneg %p177
    $region26: #{decoder_block_forward.4} parent=5 // pred_check_branch
      %180 = sbr.rel (%p178) target = $region28
    $region27: #{decoder_block_forward.4} parent=5 // pred_region
      // Predicated region
      $region29: #{decoder_block_forward.4} parent=27 // pred_check
        %p181 = pneg %p32
      $region30: #{decoder_block_forward.4} parent=27 // pred_check_branch
        %183 = sbr.rel (%p181) target = $region32
      $region31: #{decoder_block_forward.4} parent=27 // pred_region
        %p184 = scmp.lt.s32.totalorder %s12, 1
        %s185 = scalar_select %p184, %s12, 1
        %s186 = smul.addr %s185, 2
        %s187 = smul.addr %s186, 4
        %s188 = scalar_lea.vmem %s0, %s187
      $region32: #{decoder_block_forward.4} parent=27 // pred_fallthru
        _
    $region28: #{decoder_block_forward.4} parent=5 // pred_fallthru
      _
    %p189 = scmp.le.s32.totalorder 1, %s12
    %p190 = scmp.lt.s32.totalorder %s12, 3
    %p191 = pnand %p189, %p190
    %p192 = pneg %p191
    // Predicated region
    $region33: #{decoder_block_forward.4} parent=5 // pred_check
      _
    $region34: #{decoder_block_forward.4} parent=5 // pred_check_branch
      %194 = sbr.rel (%p191) target = $region36
    $region35: #{decoder_block_forward.4} parent=5 // pred_region
      %s195 = ssub.s32 %s12, 1
      %p196 = scmp.lt.s32.totalorder %s17, 1
      %s197 = scalar_select %p196, %s17, 1
      %s198 = smul.addr %s197, 2
      %s199 = smul.addr %s198, 4
      %s200 = scalar_lea.vmem %s0, %s199
      %p201 = pneg %p38
      %p202 = pneg %p35
      %p203 = pneg %p59
      %p204 = pneg %p56
      %p205 = pneg %p80
      %p206 = pneg %p77
      %p207 = pneg %p101
      %p208 = pneg %p98
      %p209 = pneg %p127
      %p210 = pneg %p124
      %p211 = scmp.lt.s32.totalorder %s17, 1
      %s212 = scalar_select %p211, %s17, 1
      %s213 = smul.addr %s212, 4
      %s214 = smul.addr %s213, 8
      %s215 = scalar_lea.vmem %s4, %s214
      %p216 = pneg %p153
      %p217 = pneg %p150
      %p218 = scmp.lt.s32.totalorder %s17, 1
      %s219 = scalar_select %p218, %s17, 1
      %s220 = smul.addr %s219, 4
      %s221 = smul.addr %s220, 8
      %s222 = scalar_lea.vmem %s5, %s221
      %p223 = scmp.lt.s32.totalorder %s17, 1
      %s224 = scalar_select %p223, %s17, 1
      %s225 = smul.addr %s224, 2
      %s226 = smul.addr %s225, 4
      %s227 = scalar_lea.vmem %s0, %s226
      %p228 = scmp.lt.s32.totalorder %s17, 1
      %s229 = scalar_select %p228, %s17, 1
      %s230 = smul.addr %s229, 4
      %s231 = smul.addr %s230, 8
      %s232 = scalar_lea.vmem %s4, %s231
      %p233 = scmp.lt.s32.totalorder %s17, 1
      %s234 = scalar_select %p233, %s17, 1
      %s235 = smul.addr %s234, 4
      %s236 = smul.addr %s235, 8
      %s237 = scalar_lea.vmem %s5, %s236
      %v239 = vld [vmem:[%s227] sm:$0xff]
      %v240 = vld [vmem:[%s1] sm:$0xf]
      %242 = vset.pattern.permute.xlu0 0
      %243 = vperm.xlu0 %242, %v240
      %v244 = vpop.permute.xlu0 %243
      %v246 = vunpack.c.l.s4 839922192
      %v247 = vunpack.c.0.s8 %v246
      %v248 = vlaneseq
      %v249 = vshrl.u32 %v248, 7
      %v250 = vsub.s32 %v247, %v249
      %v251 = vrot.slane %v244, %v250
      %v253 = vmul.f32 %v239, %v251
      %v254 = vld [vmem:[%s2] sm:$0xf]
      %256 = vset.pattern.permute.xlu0 0
      %257 = vperm.xlu0 %256, %v254
      %v258 = vpop.permute.xlu0 %257
      %v260 = vunpack.c.l.s4 839922192
      %v261 = vunpack.c.0.s8 %v260
      %v262 = vlaneseq
      %v263 = vshrl.u32 %v262, 7
      %v264 = vsub.s32 %v261, %v263
      %v265 = vrot.slane %v258, %v264
      %v267 = vadd.f32 %v253, %v265
      %v268 = vmax.f32 %v267, 0.0
      %269 = vst [vmem:[#allocation2] sm:$0xff] 0.0
      %270 = vst [vmem:[#allocation2 + $0x8] sm:$0xff] 0.0
      %271 = vst [vmem:[#allocation2 + $0x10] sm:$0xff] 0.0
      %vm272 = vcmask 138240
      %273 = vst.msk [vmem:[#allocation2 + $0x18] sm:$0xff] %vm272, 0.0
      %v275 = vcombine.high %v268, %v268
      %277 = vst [vmem:[#allocation2 + $0x8] sm:$0xf] %v268
      %278 = vst [vmem:[#allocation2 + $0x10] sm:$0xf] %v275
      %v279 = vlaneseq
      %v280 = vand.u32 %v279, 127
      %v281 = vadd.s32 %v280, 128
      %vm282 = vcmp.lt.s32.totalorder %v280, 0
      %v283 = vsub.s32 0, %v280
      %v284 = vsel %vm282, %v283, %v280
      %v285 = vshrl.u32 %v284, 4
      %v286 = vand.u32 %v284, 15
      %v287 = vsub.s32 0, %v286
      %v288 = vsel %vm282, %v287, %v286
      %vm289 = vcmp.lt.s32.totalorder %v281, 0
      %v290 = vsub.s32 0, %v281
      %v291 = vsel %vm289, %v290, %v281
      %v292 = vshrl.u32 %v291, 4
      %v293 = vand.u32 %v291, 15
      %v294 = vsub.s32 0, %v293
      %v295 = vsel %vm289, %v294, %v293
      %vm296 = vcmp.ne.s32.totalorder %v288, 0
      %vm297 = vcmp.ne.s32.totalorder %v295, 0
      %vm298 = vcmp.lt.s32.totalorder %v288, 0
      %vm299 = vcmp.lt.s32.totalorder %v295, 0
      %vm300 = vmand %vm298, %vm296
      %vm301 = vmand %vm299, %vm297
      %v302 = vadd.s32 %v288, 16
      %v303 = vadd.s32 %v295, 16
      %v304 = vsel %vm300, %v302, %v288
      %v305 = vsel %vm301, %v303, %v295
      %v306 = vld [vmem:[#allocation2 + $0x8] sm:$0xff]
      %v307 = vld [vmem:[#allocation2 + $0x10] sm:$0xff]
      %v308 = vld [vmem:[#allocation2 + $0x18] sm:$0xff]
      %v309 = vadd.s32 %v304, 1
      %v310 = vadd.s32 %v305, 1
      %vm311 = vcmp.ge.s32.totalorder %v309, 0
      %vm312 = vcmp.ge.s32.totalorder %v310, 0
      %vm313 = vcmp.lt.s32.totalorder %v309, 16
      %vm314 = vcmp.lt.s32.totalorder %v310, 16
      %vm315 = vmand %vm311, %vm313
      %vm316 = vmand %vm312, %vm314
      %v317 = vsel %vm315, 1, 0
      %v318 = vsel %vm316, 1, 0
      %vm319 = vcmp.eq.s32.totalorder %v317, 1
      %vm320 = vcmp.eq.s32.totalorder %v318, 1
      %324 = vrot.lane.b32.xlu0 %v306, 127
      %v325 = vpop.permute.xlu0 %324
      %326 = vrot.lane.b32.xlu0 %v307, 127
      %v327 = vpop.permute.xlu0 %326
      %328 = vrot.lane.b32.xlu0 %v308, 127
      %v329 = vpop.permute.xlu0 %328
      %vm330 = vcmask 1039360
      %v331 = vsel %vm330, %v325, %v327
      %v332 = vsel %vm330, %v327, %v329
      %v335 = vsel %vm319, %v331, 0.0
      %v336 = vsel %vm320, %v332, 0.0
      %337 = vrot.lane.b32.xlu0 %v306, 111
      %v338 = vpop.permute.xlu0 %337
      %339 = vrot.lane.b32.xlu0 %v307, 111
      %v340 = vpop.permute.xlu0 %339
      %341 = vrot.lane.b32.xlu0 %v308, 111
      %v342 = vpop.permute.xlu0 %341
      %vm343 = vcmask 908288
      %v344 = vsel %vm343, %v338, %v340
      %v345 = vsel %vm343, %v340, %v342
      %v348 = vsel %vm319, %v344, 0.0
      %v349 = vsel %vm320, %v345, 0.0
      %350 = vrot.lane.b32.xlu0 %v306, 112
      %v351 = vpop.permute.xlu0 %350
      %352 = vrot.lane.b32.xlu0 %v307, 112
      %v353 = vpop.permute.xlu0 %352
      %354 = vrot.lane.b32.xlu0 %v308, 112
      %v355 = vpop.permute.xlu0 %354
      %vm356 = vcmask 916480
      %v357 = vsel %vm356, %v351, %v353
      %v358 = vsel %vm356, %v353, %v355
      %v361 = vpack.c.bf16 %v335, %v306
      %v362 = vpack.c.bf16 %v336, %v307
      %v363 = vpack.c.bf16 %v348, %v357
      %v364 = vpack.c.bf16 %v349, %v358
      %v365 = vld [vmem:[%s3] sm:$0xf]
      %v366 = vld [vmem:[%s3 + $0x4] sm:$0xf]
      %v369 = vunpack.c.l.b16 %v365
      %v370 = vunpack.c.l.b16 %v366
      %v371 = vpack.c.b16 %v370, %v369
      %vm372 = vcmask 261120
      %v374 = vsel %vm372, %v371, 0
      %376 = vmatprep.subr.bf16.mxu0 0
      %377 = vmatpush1.bf16.msra.mxu0 0
      %378 = vmatprep.subr.bf16.mxu0 0
      %379 = vmatpush1.bf16.msra.mxu0 0
      %380 = vmatprep.subr.bf16.mxu0 0
      %381 = vmatpush1.bf16.msra.mxu0 0
      %382 = vmatprep.subr.bf16.mxu0 0
      %383 = vmatpush1.bf16.msra.mxu0 0
      %384 = vmatprep.subr.bf16.mxu0 0
      %385 = vmatpush1.bf16.msra.mxu0 0
      %386 = vmatprep.subr.bf16.mxu0 0
      %387 = vmatpush1.bf16.msra.mxu0 0
      %388 = vmatprep.subr.bf16.mxu0 %v364
      %389 = vmatpush1.bf16.msra.mxu0 %v363
      %390 = vmatprep.subr.bf16.mxu0 %v362
      %391 = vmatpush1.bf16.msra.mxu0 %v361
      %392 = vmatprep.subr.bf16.mxu0 0
      %393 = vmatpush2.bf16.msra.mxu0 0
      %394 = vmatprep.subr.bf16.mxu0 0
      %395 = vmatpush2.bf16.msra.mxu0 0
      %396 = vmatprep.subr.bf16.mxu0 0
      %397 = vmatpush2.bf16.msra.mxu0 0
      %398 = vmatprep.subr.bf16.mxu0 0
      %399 = vmatpush2.bf16.msra.mxu0 0
      %400 = vmatprep.subr.bf16.mxu0 0
      %401 = vmatpush2.bf16.msra.mxu0 0
      %402 = vmatprep.subr.bf16.mxu0 0
      %403 = vmatpush2.bf16.msra.mxu0 0
      %404 = vmatprep.subr.bf16.mxu0 0
      %405 = vmatpush2.bf16.msra.mxu0 0
      %406 = vmatprep.subr.bf16.mxu0 0
      %407 = vmatpush2.bf16.msra.mxu0 0
      %408 = vmatprep.mubr.bf16.mxu0 0
      %409 = vmatmul.mubr.bf16.gmra.mxu0 %v374
      %v410 = vpop.f32.mrf.mxu0
      %v411 = vadd.f32 0.0, %v410
      %v412 = vpop.f32.mrf.mxu0
      %v413 = vadd.f32 0.0, %v412
      %v414 = vpop.f32.mrf.mxu0
      %v415 = vadd.f32 0.0, %v414
      %v416 = vpop.f32.mrf.mxu0
      %v417 = vadd.f32 0.0, %v416
      %418 = vdwg.mxu0
      %419 = vst [vmem:[%s232] sm:$0xff] %v411
      %420 = vst [vmem:[%s232 + $0x8] sm:$0xff] %v413
      %421 = vst [vmem:[%s232 + $0x10] sm:$0xff] %v415
      %422 = vst [vmem:[%s232 + $0x18] sm:$0xff] %v417
      %v423 = vadd.f32 %v411, %v413
      %424 = vadd.xlane.f32.xlu0 %v423
      %v425 = vpop.xlane.xlu0 %424
      %v426 = vadd.f32 %v415, %v417
      %427 = vadd.xlane.f32.xlu0 %v426
      %v428 = vpop.xlane.xlu0 %427
      %vm429 = vcmask 7168
      %430 = vst.msk [vmem:[%s237] sm:$0xff] %vm429, %v425
      %431 = vst.msk [vmem:[%s237 + $0x8] sm:$0xff] %vm429, %v428
      %v432 = vmul.f32 %v411, %v411
      %v433 = vmul.f32 %v413, %v413
      %v434 = vmul.f32 %v415, %v415
      %v435 = vmul.f32 %v417, %v417
      %v436 = vadd.f32 %v432, %v433
      %437 = vadd.xlane.f32.xlu0 %v436
      %v438 = vpop.xlane.xlu0 %437
      %v439 = vadd.f32 %v434, %v435
      %440 = vadd.xlane.f32.xlu0 %v439
      %v441 = vpop.xlane.xlu0 %440
      %442 = vst.msk [vmem:[%s237 + $0x10] sm:$0xff] %vm429, %v438
      %443 = vst.msk [vmem:[%s237 + $0x18] sm:$0xff] %vm429, %v441
      %p444 = scmp.lt.s32.totalorder %s17, 1
      %s445 = scalar_select %p444, %s17, 1
      %s446 = smul.addr %s445, 4
      %s447 = smul.addr %s446, 8
      %s448 = scalar_lea.vmem %s4, %s447
      %p449 = scmp.lt.s32.totalorder %s17, 1
      %s450 = scalar_select %p449, %s17, 1
      %s451 = smul.addr %s450, 4
      %s452 = smul.addr %s451, 8
      %s453 = scalar_lea.vmem %s5, %s452
      // Predicated region
      $region37: #{decoder_block_forward.4} parent=35 // pred_check
        %p454 = pneg %p124
      $region38: #{decoder_block_forward.4} parent=35 // pred_check_branch
        %456 = sbr.rel (%p454) target = $region40
      $region39: #{decoder_block_forward.4} parent=35 // pred_region
        _
      $region40: #{decoder_block_forward.4} parent=35 // pred_fallthru
        _
      // Predicated region
      $region41: #{decoder_block_forward.4} parent=35 // pred_check
        %p457 = pneg %p150
      $region42: #{decoder_block_forward.4} parent=35 // pred_check_branch
        %459 = sbr.rel (%p457) target = $region44
      $region43: #{decoder_block_forward.4} parent=35 // pred_region
        _
      $region44: #{decoder_block_forward.4} parent=35 // pred_fallthru
        _
    $region36: #{decoder_block_forward.4} parent=5 // pred_fallthru
      _
    %p460 = scmp.le.s32.totalorder 2, %s12
    // Predicated region
    $region45: #{decoder_block_forward.4} parent=5 // pred_check
      %p461 = pneg %p460
    $region46: #{decoder_block_forward.4} parent=5 // pred_check_branch
      %463 = sbr.rel (%p461) target = $region48
    $region47: #{decoder_block_forward.4} parent=5 // pred_region
      %s464 = ssub.s32 %s12, 2
      // Predicated region
      $region49: #{decoder_block_forward.4} parent=47 // pred_check
        %p465 = pneg %p130
      $region50: #{decoder_block_forward.4} parent=47 // pred_check_branch
        %467 = sbr.rel (%p465) target = $region52
      $region51: #{decoder_block_forward.4} parent=47 // pred_region
        %p468 = scmp.lt.s32.totalorder %s18, 1
        %s469 = scalar_select %p468, %s18, 1
        %s470 = smul.addr %s469, 4
        %s471 = smul.addr %s470, 8
        %s472 = scalar_lea.vmem %s4, %s471
      $region52: #{decoder_block_forward.4} parent=47 // pred_fallthru
        _
      // Predicated region
      $region53: #{decoder_block_forward.4} parent=47 // pred_check
        %p473 = pneg %p156
      $region54: #{decoder_block_forward.4} parent=47 // pred_check_branch
        %475 = sbr.rel (%p473) target = $region56
      $region55: #{decoder_block_forward.4} parent=47 // pred_region
        %p476 = scmp.lt.s32.totalorder %s18, 1
        %s477 = scalar_select %p476, %s18, 1
        %s478 = smul.addr %s477, 4
        %s479 = smul.addr %s478, 8
        %s480 = scalar_lea.vmem %s5, %s479
      $region56: #{decoder_block_forward.4} parent=47 // pred_fallthru
        _
    $region48: #{decoder_block_forward.4} parent=5 // pred_fallthru
      _
  $region6: #{decoder_block_forward.4} parent=0 // loop_footer
    %s16 = sadd.s32 1, %s12
  $region7: #{decoder_block_forward.4} parent=0 // loop_footer_branch
    %11 = sbr.rel target = $region3
  $region8: #{decoder_block_forward.4} parent=0 // loop_exit
    _

// kernel: decoder_block_forward.5
$region0: #{decoder_block_forward.5}
  #allocation0 [shape = 'u32[]', space=smem, size = 0x4, offset = 0x4, fixed_abs, tag = 'smem constant byte address 0x4 - core index']
  #allocation1 [shape = 'u32[144,128]{1,0:T(1,128)}', space=vmem, size = 0x12000, scoped, tag = 'internal scratch']
  #allocation2 [shape = 'f32[16,401]{1,0:T(8,128)}', space=vmem, size = 0x8000, scoped, tag = 'scratch operand']
  %s0 = inlined_call_operand.vmem [shape: f32[2,16,256], index: 0, kind: input, shape index: {}]
  %s1 = inlined_call_operand.vmem [shape: f32[16,1], index: 1, kind: input, shape index: {}]
  %s2 = inlined_call_operand.vmem [shape: f32[16,1], index: 2, kind: input, shape index: {}]
  %s3 = inlined_call_operand.vmem [shape: bf16[32,144], index: 3, kind: input, shape index: {}]
  %s4 = inlined_call_operand.vmem [shape: f32[2,32,256], index: 4, kind: output, shape index: {0}]
  %s5 = inlined_call_operand.vmem [shape: f32[2,64,1], index: 5, kind: output, shape index: {1}]
  %6 = xla_tuple %s4, %s5
  %s7 = sld [smem:[#allocation0]]
  $region57: #{decoder_block_forward.5} parent=0
    _
  %s9 = ssub.s32 1, %s7
  %s10 = scalar_select 0, %s9, %s7
  loop: start=0, step=1, limit=4
  $region2: #{decoder_block_forward.5} parent=0 // loop_pre_header
    _
  $region3: #{decoder_block_forward.5} parent=0 // loop_header
    %s12 = sphi 0, %s16
    %p13 = scmp.ge.s32.totalorder %s12, 4
    %s22 = sphi 0, %s24
    %s25 = sphi 0, %s22
    %s26 = sphi 0, %s25
    %s42 = sphi 0, %s26
    %s46 = sphi 0, %s46
    %s48 = sphi 0, %s46
    %s49 = sphi 0, %s48
    %s63 = sphi 0, %s49
    %s67 = sphi 0, %s67
    %s69 = sphi 0, %s67
    %s70 = sphi 0, %s69
    %s84 = sphi 0, %s70
    %s88 = sphi 0, %s88
    %s90 = sphi 0, %s88
    %s91 = sphi 0, %s90
    %s105 = sphi 0, %s91
    %s111 = sphi 0, %s113
    %s114 = sphi 0, %s111
    %s115 = sphi 0, %s114
    %s131 = sphi 0, %s115
    %s137 = sphi 0, %s139
    %s140 = sphi 0, %s137
    %s141 = sphi 0, %s140
    %s157 = sphi 0, %s141
  $region4: #{decoder_block_forward.5} parent=0 // loop_header_branch
    %15 = sbr.rel (%p13) target = $region8
  $region5: #{decoder_block_forward.5} parent=0 // loop_body
    %s17 = ssub.s32 %s12, 1
    %s18 = ssub.s32 %s12, 2
    %s19 = sadd.s32 %s12, 1
    %s20 = ssub.s32 %s12, %s19
    %p21 = scmp.eq.s32.totalorder %s20, 0
    %s23 = sadd.s32 %s22, 1
    %s24 = scalar_select %p21, %s22, %s23
    %p27 = pneg %p21
    %p28 = scmp.eq.s32.totalorder %s12, 1
    %p29 = por %p27, %p28
    %p30 = scmp.ne.s32.totalorder %s22, %s25
    %p31 = scmp.eq.s32.totalorder %s12, 0
    %p32 = por %p30, %p31
    %p33 = scmp.ne.s32.totalorder %s22, %s25
    %p34 = scmp.eq.s32.totalorder %s17, 1
    %p35 = por %p33, %p34
    %p36 = scmp.ne.s32.totalorder %s25, %s26
    %p37 = scmp.eq.s32.totalorder %s17, 0
    %p38 = por %p36, %p37
    %p39 = scmp.ne.s32.totalorder %s25, %s26
    %p40 = scmp.eq.s32.totalorder %s18, 1
    %p41 = por %p39, %p40
    %p43 = scmp.ne.s32.totalorder %s26, %s42
    %p44 = scmp.eq.s32.totalorder %s18, 0
    %p45 = por %p43, %p44
    %s47 = sadd.s32 %s46, 1
    %p50 = scmp.eq.s32.totalorder %s12, 1
    %p51 = scmp.ne.s32.totalorder %s46, %s48
    %p52 = scmp.eq.s32.totalorder %s12, 0
    %p53 = por %p51, %p52
    %p54 = scmp.ne.s32.totalorder %s46, %s48
    %p55 = scmp.eq.s32.totalorder %s17, 1
    %p56 = por %p54, %p55
    %p57 = scmp.ne.s32.totalorder %s48, %s49
    %p58 = scmp.eq.s32.totalorder %s17, 0
    %p59 = por %p57, %p58
    %p60 = scmp.ne.s32.totalorder %s48, %s49
    %p61 = scmp.eq.s32.totalorder %s18, 1
    %p62 = por %p60, %p61
    %p64 = scmp.ne.s32.totalorder %s49, %s63
    %p65 = scmp.eq.s32.totalorder %s18, 0
    %p66 = por %p64, %p65
    %s68 = sadd.s32 %s67, 1
    %p71 = scmp.eq.s32.totalorder %s12, 1
    %p72 = scmp.ne.s32.totalorder %s67, %s69
    %p73 = scmp.eq.s32.totalorder %s12, 0
    %p74 = por %p72, %p73
    %p75 = scmp.ne.s32.totalorder %s67, %s69
    %p76 = scmp.eq.s32.totalorder %s17, 1
    %p77 = por %p75, %p76
    %p78 = scmp.ne.s32.totalorder %s69, %s70
    %p79 = scmp.eq.s32.totalorder %s17, 0
    %p80 = por %p78, %p79
    %p81 = scmp.ne.s32.totalorder %s69, %s70
    %p82 = scmp.eq.s32.totalorder %s18, 1
    %p83 = por %p81, %p82
    %p85 = scmp.ne.s32.totalorder %s70, %s84
    %p86 = scmp.eq.s32.totalorder %s18, 0
    %p87 = por %p85, %p86
    %s89 = sadd.s32 %s88, 1
    %p92 = scmp.eq.s32.totalorder %s12, 1
    %p93 = scmp.ne.s32.totalorder %s88, %s90
    %p94 = scmp.eq.s32.totalorder %s12, 0
    %p95 = por %p93, %p94
    %p96 = scmp.ne.s32.totalorder %s88, %s90
    %p97 = scmp.eq.s32.totalorder %s17, 1
    %p98 = por %p96, %p97
    %p99 = scmp.ne.s32.totalorder %s90, %s91
    %p100 = scmp.eq.s32.totalorder %s17, 0
    %p101 = por %p99, %p100
    %p102 = scmp.ne.s32.totalorder %s90, %s91
    %p103 = scmp.eq.s32.totalorder %s18, 1
    %p104 = por %p102, %p103
    %p106 = scmp.ne.s32.totalorder %s91, %s105
    %p107 = scmp.eq.s32.totalorder %s18, 0
    %p108 = por %p106, %p107
    %s109 = ssub.s32 %s12, %s19
    %p110 = scmp.eq.s32.totalorder %s109, 0
    %s112 = sadd.s32 %s111, 1
    %s113 = scalar_select %p110, %s111, %s112
    %p116 = pneg %p110
    %p117 = scmp.eq.s32.totalorder %s12, 1
    %p118 = por %p116, %p117
    %p119 = scmp.ne.s32.totalorder %s111, %s114
    %p120 = scmp.eq.s32.totalorder %s12, 0
    %p121 = por %p119, %p120
    %p122 = scmp.ne.s32.totalorder %s111, %s114
    %p123 = scmp.eq.s32.totalorder %s17, 1
    %p124 = por %p122, %p123
    %p125 = scmp.ne.s32.totalorder %s114, %s115
    %p126 = scmp.eq.s32.totalorder %s17, 0
    %p127 = por %p125, %p126
    %p128 = scmp.ne.s32.totalorder %s114, %s115
    %p129 = scmp.eq.s32.totalorder %s18, 1
    %p130 = por %p128, %p129
    %p132 = scmp.ne.s32.totalorder %s115, %s131
    %p133 = scmp.eq.s32.totalorder %s18, 0
    %p134 = por %p132, %p133
    %s135 = ssub.s32 %s12, %s19
    %p136 = scmp.eq.s32.totalorder %s135, 0
    %s138 = sadd.s32 %s137, 1
    %s139 = scalar_select %p136, %s137, %s138
    %p142 = pneg %p136
    %p143 = scmp.eq.s32.totalorder %s12, 1
    %p144 = por %p142, %p143
    %p145 = scmp.ne.s32.totalorder %s137, %s140
    %p146 = scmp.eq.s32.totalorder %s12, 0
    %p147 = por %p145, %p146
    %p148 = scmp.ne.s32.totalorder %s137, %s140
    %p149 = scmp.eq.s32.totalorder %s17, 1
    %p150 = por %p148, %p149
    %p151 = scmp.ne.s32.totalorder %s140, %s141
    %p152 = scmp.eq.s32.totalorder %s17, 0
    %p153 = por %p151, %p152
    %p154 = scmp.ne.s32.totalorder %s140, %s141
    %p155 = scmp.eq.s32.totalorder %s18, 1
    %p156 = por %p154, %p155
    %p158 = scmp.ne.s32.totalorder %s141, %s157
    %p159 = scmp.eq.s32.totalorder %s18, 0
    %p160 = por %p158, %p159
    %p161 = scmp.le.s32.totalorder 1, %s12
    %p162 = scmp.lt.s32.totalorder %s12, 3
    %p163 = pnand %p161, %p162
    %p164 = pneg %p163
    // Predicated region
    $region9: #{decoder_block_forward.5} parent=5 // pred_check
      _
    $region10: #{decoder_block_forward.5} parent=5 // pred_check_branch
      %166 = sbr.rel (%p163) target = $region12
    $region11: #{decoder_block_forward.5} parent=5 // pred_region
      %s167 = ssub.s32 %s12, 1
      // Predicated region
      $region13: #{decoder_block_forward.5} parent=11 // pred_check
        %p168 = pneg %p59
      $region14: #{decoder_block_forward.5} parent=11 // pred_check_branch
        %170 = sbr.rel (%p168) target = $region16
      $region15: #{decoder_block_forward.5} parent=11 // pred_region
        _
      $region16: #{decoder_block_forward.5} parent=11 // pred_fallthru
        _
      // Predicated region
      $region17: #{decoder_block_forward.5} parent=11 // pred_check
        %p171 = pneg %p80
      $region18: #{decoder_block_forward.5} parent=11 // pred_check_branch
        %173 = sbr.rel (%p171) target = $region20
      $region19: #{decoder_block_forward.5} parent=11 // pred_region
        _
      $region20: #{decoder_block_forward.5} parent=11 // pred_fallthru
        _
      // Predicated region
      $region21: #{decoder_block_forward.5} parent=11 // pred_check
        %p174 = pneg %p101
      $region22: #{decoder_block_forward.5} parent=11 // pred_check_branch
        %176 = sbr.rel (%p174) target = $region24
      $region23: #{decoder_block_forward.5} parent=11 // pred_region
        _
      $region24: #{decoder_block_forward.5} parent=11 // pred_fallthru
        _
    $region12: #{decoder_block_forward.5} parent=5 // pred_fallthru
      _
    %p177 = scmp.lt.s32.totalorder %s12, 2
    // Predicated region
    $region25: #{decoder_block_forward.5} parent=5 // pred_check
      %p178 = pneg %p177
    $region26: #{decoder_block_forward.5} parent=5 // pred_check_branch
      %180 = sbr.rel (%p178) target = $region28
    $region27: #{decoder_block_forward.5} parent=5 // pred_region
      // Predicated region
      $region29: #{decoder_block_forward.5} parent=27 // pred_check
        %p181 = pneg %p32
      $region30: #{decoder_block_forward.5} parent=27 // pred_check_branch
        %183 = sbr.rel (%p181) target = $region32
      $region31: #{decoder_block_forward.5} parent=27 // pred_region
        %p184 = scmp.lt.s32.totalorder %s12, 1
        %s185 = scalar_select %p184, %s12, 1
        %s186 = smul.addr %s185, 4
        %s187 = smul.addr %s186, 8
        %s188 = scalar_lea.vmem %s0, %s187
      $region32: #{decoder_block_forward.5} parent=27 // pred_fallthru
        _
    $region28: #{decoder_block_forward.5} parent=5 // pred_fallthru
      _
    %p189 = scmp.le.s32.totalorder 1, %s12
    %p190 = scmp.lt.s32.totalorder %s12, 3
    %p191 = pnand %p189, %p190
    %p192 = pneg %p191
    // Predicated region
    $region33: #{decoder_block_forward.5} parent=5 // pred_check
      _
    $region34: #{decoder_block_forward.5} parent=5 // pred_check_branch
      %194 = sbr.rel (%p191) target = $region36
    $region35: #{decoder_block_forward.5} parent=5 // pred_region
      %s195 = ssub.s32 %s12, 1
      %p196 = scmp.lt.s32.totalorder %s17, 1
      %s197 = scalar_select %p196, %s17, 1
      %s198 = smul.addr %s197, 4
      %s199 = smul.addr %s198, 8
      %s200 = scalar_lea.vmem %s0, %s199
      %p201 = pneg %p38
      %p202 = pneg %p35
      %p203 = pneg %p59
      %p204 = pneg %p56
      %p205 = pneg %p80
      %p206 = pneg %p77
      %p207 = pneg %p101
      %p208 = pneg %p98
      %p209 = pneg %p127
      %p210 = pneg %p124
      %p211 = scmp.lt.s32.totalorder %s17, 1
      %s212 = scalar_select %p211, %s17, 1
      %s213 = smul.addr %s212, 8
      %s214 = smul.addr %s213, 8
      %s215 = scalar_lea.vmem %s4, %s214
      %p216 = pneg %p153
      %p217 = pneg %p150
      %p218 = scmp.lt.s32.totalorder %s17, 1
      %s219 = scalar_select %p218, %s17, 1
      %s220 = smul.addr %s219, 8
      %s221 = smul.addr %s220, 8
      %s222 = scalar_lea.vmem %s5, %s221
      %p223 = scmp.lt.s32.totalorder %s17, 1
      %s224 = scalar_select %p223, %s17, 1
      %s225 = smul.addr %s224, 4
      %s226 = smul.addr %s225, 8
      %s227 = scalar_lea.vmem %s0, %s226
      %p228 = scmp.lt.s32.totalorder %s17, 1
      %s229 = scalar_select %p228, %s17, 1
      %s230 = smul.addr %s229, 8
      %s231 = smul.addr %s230, 8
      %s232 = scalar_lea.vmem %s4, %s231
      %p233 = scmp.lt.s32.totalorder %s17, 1
      %s234 = scalar_select %p233, %s17, 1
      %s235 = smul.addr %s234, 8
      %s236 = smul.addr %s235, 8
      %s237 = scalar_lea.vmem %s5, %s236
      %v239 = vld [vmem:[%s227] sm:$0xff]
      %v240 = vld [vmem:[%s227 + $0x8] sm:$0xff]
      %v241 = vld [vmem:[%s227 + $0x10] sm:$0xff]
      %v242 = vld [vmem:[%s227 + $0x18] sm:$0xff]
      %v243 = vld [vmem:[%s1] sm:$0xff]
      %v244 = vld [vmem:[%s1 + $0x8] sm:$0xff]
      %246 = vset.pattern.permute.xlu0 0
      %247 = vperm.xlu0 %246, %v243
      %v248 = vpop.permute.xlu0 %247
      %251 = vset.pattern.permute.xlu0 0
      %252 = vperm.xlu0 %251, %v244
      %v253 = vpop.permute.xlu0 %252
      %v255 = vmul.f32 %v239, %v248
      %v256 = vmul.f32 %v240, %v248
      %v257 = vmul.f32 %v241, %v253
      %v258 = vmul.f32 %v242, %v253
      %v259 = vld [vmem:[%s2] sm:$0xff]
      %v260 = vld [vmem:[%s2 + $0x8] sm:$0xff]
      %262 = vset.pattern.permute.xlu0 0
      %263 = vperm.xlu0 %262, %v259
      %v264 = vpop.permute.xlu0 %263
      %267 = vset.pattern.permute.xlu0 0
      %268 = vperm.xlu0 %267, %v260
      %v269 = vpop.permute.xlu0 %268
      %v271 = vadd.f32 %v255, %v264
      %v272 = vadd.f32 %v256, %v264
      %v273 = vadd.f32 %v257, %v269
      %v274 = vadd.f32 %v258, %v269
      %v275 = vmax.f32 %v271, 0.0
      %v276 = vmax.f32 %v272, 0.0
      %v277 = vmax.f32 %v273, 0.0
      %v278 = vmax.f32 %v274, 0.0
      %279 = vst [vmem:[#allocation2] sm:$0xff] 0.0
      %280 = vst [vmem:[#allocation2 + $0x8] sm:$0xff] 0.0
      %281 = vst [vmem:[#allocation2 + $0x10] sm:$0xff] 0.0
      %vm282 = vcmask 138240
      %283 = vst.msk [vmem:[#allocation2 + $0x18] sm:$0xff] %vm282, 0.0
      %284 = vst [vmem:[#allocation2 + $0x20] sm:$0xff] 0.0
      %285 = vst [vmem:[#allocation2 + $0x28] sm:$0xff] 0.0
      %286 = vst [vmem:[#allocation2 + $0x30] sm:$0xff] 0.0
      %287 = vst.msk [vmem:[#allocation2 + $0x38] sm:$0xff] %vm282, 0.0
      %288 = vst [vmem:[#allocation2 + $0x8] sm:$0xff] %v275
      %289 = vst [vmem:[#allocation2 + $0x10] sm:$0xff] %v276
      %290 = vst [vmem:[#allocation2 + $0x28] sm:$0xff] %v277
      %291 = vst [vmem:[#allocation2 + $0x30] sm:$0xff] %v278
      %v292 = vlaneseq
      %v293 = vand.u32 %v292, 127
      %v294 = vadd.s32 %v293, 128
      %vm295 = vcmp.lt.s32.totalorder %v293, 0
      %v296 = vsub.s32 0, %v293
      %v297 = vsel %vm295, %v296, %v293
      %v298 = vshrl.u32 %v297, 4
      %v299 = vand.u32 %v297, 15
      %v300 = vsub.s32 0, %v299
      %v301 = vsel %vm295, %v300, %v299
      %vm302 = vcmp.lt.s32.totalorder %v294, 0
      %v303 = vsub.s32 0, %v294
      %v304 = vsel %vm302, %v303, %v294
      %v305 = vshrl.u32 %v304, 4
      %v306 = vand.u32 %v304, 15
      %v307 = vsub.s32 0, %v306
      %v308 = vsel %vm302, %v307, %v306
      %vm309 = vcmp.ne.s32.totalorder %v301, 0
      %vm310 = vcmp.ne.s32.totalorder %v308, 0
      %vm311 = vcmp.lt.s32.totalorder %v301, 0
      %vm312 = vcmp.lt.s32.totalorder %v308, 0
      %vm313 = vmand %vm311, %vm309
      %vm314 = vmand %vm312, %vm310
      %v315 = vadd.s32 %v301, 16
      %v316 = vadd.s32 %v308, 16
      %v317 = vsel %vm313, %v315, %v301
      %v318 = vsel %vm314, %v316, %v308
      %v319 = vld [vmem:[#allocation2] sm:$0xff]
      %v320 = vld [vmem:[#allocation2 + $0x8] sm:$0xff]
      %v321 = vld [vmem:[#allocation2 + $0x10] sm:$0xff]
      %v322 = vld [vmem:[#allocation2 + $0x20] sm:$0xff]
      %v323 = vld [vmem:[#allocation2 + $0x28] sm:$0xff]
      %v324 = vld [vmem:[#allocation2 + $0x30] sm:$0xff]
      %v325 = vadd.s32 %v317, 4294967295
      %v326 = vadd.s32 %v318, 4294967295
      %vm327 = vcmp.ge.s32.totalorder %v325, 0
      %vm328 = vcmp.ge.s32.totalorder %v326, 0
      %vm329 = vcmp.lt.s32.totalorder %v325, 16
      %vm330 = vcmp.lt.s32.totalorder %v326, 16
      %vm331 = vmand %vm327, %vm329
      %vm332 = vmand %vm328, %vm330
      %v333 = vsel %vm331, 1, 0
      %v334 = vsel %vm332, 1, 0
      %vm335 = vcmp.eq.s32.totalorder %v333, 1
      %vm336 = vcmp.eq.s32.totalorder %v334, 1
      %343 = vrot.lane.b32.xlu0 %v319, 17
      %v344 = vpop.permute.xlu0 %343
      %345 = vrot.lane.b32.xlu0 %v320, 17
      %v346 = vpop.permute.xlu0 %345
      %347 = vrot.lane.b32.xlu0 %v321, 17
      %v348 = vpop.permute.xlu0 %347
      %349 = vrot.lane.b32.xlu0 %v322, 17
      %v350 = vpop.permute.xlu0 %349
      %351 = vrot.lane.b32.xlu0 %v323, 17
      %v352 = vpop.permute.xlu0 %351
      %353 = vrot.lane.b32.xlu0 %v324, 17
      %v354 = vpop.permute.xlu0 %353
      %v355 = vsel %vm282, %v344, %v346
      %v356 = vsel %vm282, %v346, %v348
      %v357 = vsel %vm282, %v350, %v352
      %v358 = vsel %vm282, %v352, %v354
      %v363 = vsel %vm335, %v355, 0.0
      %v364 = vsel %vm336, %v356, 0.0
      %v365 = vsel %vm335, %v357, 0.0
      %v366 = vsel %vm336, %v358, 0.0
      %v367 = vpack.c.bf16 %v365, %v363
      %v368 = vpack.c.bf16 %v366, %v364
      %v369 = vpack.c.bf16 %v322, %v319
      %v370 = vpack.c.bf16 %v323, %v320
      %v371 = vpack.c.bf16 %v324, %v321
      %v372 = vadd.s32 %v317, 1
      %v373 = vadd.s32 %v318, 1
      %vm374 = vcmp.ge.s32.totalorder %v372, 0
      %vm375 = vcmp.ge.s32.totalorder %v373, 0
      %vm376 = vcmp.lt.s32.totalorder %v372, 16
      %vm377 = vcmp.lt.s32.totalorder %v373, 16
      %vm378 = vmand %vm374, %vm376
      %vm379 = vmand %vm375, %vm377
      %v380 = vsel %vm378, 1, 0
      %v381 = vsel %vm379, 1, 0
      %vm382 = vcmp.eq.s32.totalorder %v380, 1
      %vm383 = vcmp.eq.s32.totalorder %v381, 1
      %384 = vrot.lane.b32.xlu0 %v319, 15
      %v385 = vpop.permute.xlu0 %384
      %386 = vrot.lane.b32.xlu0 %v320, 15
      %v387 = vpop.permute.xlu0 %386
      %388 = vrot.lane.b32.xlu0 %v321, 15
      %v389 = vpop.permute.xlu0 %388
      %390 = vrot.lane.b32.xlu0 %v322, 15
      %v391 = vpop.permute.xlu0 %390
      %392 = vrot.lane.b32.xlu0 %v323, 15
      %v393 = vpop.permute.xlu0 %392
      %394 = vrot.lane.b32.xlu0 %v324, 15
      %v395 = vpop.permute.xlu0 %394
      %vm396 = vcmask 121856
      %v397 = vsel %vm396, %v385, %v387
      %v398 = vsel %vm396, %v387, %v389
      %v399 = vsel %vm396, %v391, %v393
      %v400 = vsel %vm396, %v393, %v395
      %v405 = vsel %vm382, %v397, 0.0
      %v406 = vsel %vm383, %v398, 0.0
      %v407 = vsel %vm382, %v399, 0.0
      %v408 = vsel %vm383, %v400, 0.0
      %v409 = vpack.c.bf16 %v407, %v405
      %v410 = vpack.c.bf16 %v408, %v406
      %411 = vrot.lane.b32.xlu0 %v319, 1
      %v412 = vpop.permute.xlu0 %411
      %413 = vrot.lane.b32.xlu0 %v320, 1
      %v414 = vpop.permute.xlu0 %413
      %415 = vrot.lane.b32.xlu0 %v321, 1
      %v416 = vpop.permute.xlu0 %415
      %417 = vrot.lane.b32.xlu0 %v322, 1
      %v418 = vpop.permute.xlu0 %417
      %419 = vrot.lane.b32.xlu0 %v323, 1
      %v420 = vpop.permute.xlu0 %419
      %421 = vrot.lane.b32.xlu0 %v324, 1
      %v422 = vpop.permute.xlu0 %421
      %vm423 = vcmask 7168
      %v424 = vsel %vm423, %v412, %v414
      %v425 = vsel %vm423, %v414, %v416
      %v426 = vsel %vm423, %v418, %v420
      %v427 = vsel %vm423, %v420, %v422
      %v432 = vsel %vm335, %v424, 0.0
      %v433 = vsel %vm336, %v425, 0.0
      %v434 = vsel %vm335, %v426, 0.0
      %v435 = vsel %vm336, %v427, 0.0
      %v436 = vpack.c.bf16 %v434, %v432
      %v437 = vpack.c.bf16 %v435, %v433
      %v438 = vld [vmem:[#allocation2 + $0x18] sm:$0xff]
      %v439 = vld [vmem:[#allocation2 + $0x38] sm:$0xff]
      %442 = vrot.lane.b32.xlu0 %v320, 127
      %v443 = vpop.permute.xlu0 %442
      %444 = vrot.lane.b32.xlu0 %v321, 127
      %v445 = vpop.permute.xlu0 %444
      %446 = vrot.lane.b32.xlu0 %v438, 127
      %v447 = vpop.permute.xlu0 %446
      %448 = vrot.lane.b32.xlu0 %v323, 127
      %v449 = vpop.permute.xlu0 %448
      %450 = vrot.lane.b32.xlu0 %v324, 127
      %v451 = vpop.permute.xlu0 %450
      %452 = vrot.lane.b32.xlu0 %v439, 127
      %v453 = vpop.permute.xlu0 %452
      %vm454 = vcmask 1039360
      %v455 = vsel %vm454, %v443, %v445
      %v456 = vsel %vm454, %v445, %v447
      %v457 = vsel %vm454, %v449, %v451
      %v458 = vsel %vm454, %v451, %v453
      %v463 = vsel %vm382, %v455, 0.0
      %v464 = vsel %vm383, %v456, 0.0
      %v465 = vsel %vm382, %v457, 0.0
      %v466 = vsel %vm383, %v458, 0.0
      %v467 = vpack.c.bf16 %v465, %v463
      %v468 = vpack.c.bf16 %v466, %v464
      %469 = vrot.lane.b32.xlu0 %v320, 113
      %v470 = vpop.permute.xlu0 %469
      %471 = vrot.lane.b32.xlu0 %v321, 113
      %v472 = vpop.permute.xlu0 %471
      %473 = vrot.lane.b32.xlu0 %v438, 113
      %v474 = vpop.permute.xlu0 %473
      %475 = vrot.lane.b32.xlu0 %v323, 113
      %v476 = vpop.permute.xlu0 %475
      %477 = vrot.lane.b32.xlu0 %v324, 113
      %v478 = vpop.permute.xlu0 %477
      %479 = vrot.lane.b32.xlu0 %v439, 113
      %v480 = vpop.permute.xlu0 %479
      %vm481 = vcmask 924672
      %v482 = vsel %vm481, %v470, %v472
      %v483 = vsel %vm481, %v472, %v474
      %v484 = vsel %vm481, %v476, %v478
      %v485 = vsel %vm481, %v478, %v480
      %v490 = vsel %vm335, %v482, 0.0
      %v491 = vsel %vm336, %v483, 0.0
      %v492 = vsel %vm335, %v484, 0.0
      %v493 = vsel %vm336, %v485, 0.0
      %v494 = vpack.c.bf16 %v492, %v490
      %v495 = vpack.c.bf16 %v493, %v491
      %v496 = vpack.c.bf16 %v439, %v438
      %497 = vrot.lane.b32.xlu0 %v320, 111
      %v498 = vpop.permute.xlu0 %497
      %499 = vrot.lane.b32.xlu0 %v321, 111
      %v500 = vpop.permute.xlu0 %499
      %501 = vrot.lane.b32.xlu0 %v438, 111
      %v502 = vpop.permute.xlu0 %501
      %503 = vrot.lane.b32.xlu0 %v323, 111
      %v504 = vpop.permute.xlu0 %503
      %505 = vrot.lane.b32.xlu0 %v324, 111
      %v506 = vpop.permute.xlu0 %505
      %507 = vrot.lane.b32.xlu0 %v439, 111
      %v508 = vpop.permute.xlu0 %507
      %vm509 = vcmask 908288
      %v510 = vsel %vm509, %v498, %v500
      %v511 = vsel %vm509, %v500, %v502
      %v512 = vsel %vm509, %v504, %v506
      %v513 = vsel %vm509, %v506, %v508
      %v518 = vsel %vm382, %v510, 0.0
      %v519 = vsel %vm383, %v511, 0.0
      %v520 = vsel %vm382, %v512, 0.0
      %v521 = vsel %vm383, %v513, 0.0
      %v522 = vpack.c.bf16 %v520, %v518
      %v523 = vpack.c.bf16 %v521, %v519
      %527 = vrot.lane.b32.xlu0 %v369, 16
      %v528 = vpop.permute.xlu0 %527
      %529 = vrot.lane.b32.xlu0 %v370, 16
      %v530 = vpop.permute.xlu0 %529
      %531 = vrot.lane.b32.xlu0 %v371, 16
      %v532 = vpop.permute.xlu0 %531
      %vm533 = vcmask 130048
      %v534 = vsel %vm533, %v528, %v530
      %v535 = vsel %vm533, %v530, %v532
      %539 = vrot.lane.b32.xlu0 %v370, 112
      %v540 = vpop.permute.xlu0 %539
      %541 = vrot.lane.b32.xlu0 %v371, 112
      %v542 = vpop.permute.xlu0 %541
      %543 = vrot.lane.b32.xlu0 %v496, 112
      %v544 = vpop.permute.xlu0 %543
      %vm545 = vcmask 916480
      %v546 = vsel %vm545, %v540, %v542
      %v547 = vsel %vm545, %v542, %v544
      %v550 = vld [vmem:[%s3] sm:$0xff]
      %v551 = vld [vmem:[%s3 + $0x8] sm:$0xff]
      %v552 = vld [vmem:[%s3 + $0x10] sm:$0xff]
      %v553 = vld [vmem:[%s3 + $0x18] sm:$0xff]
      %v558 = vunpack.c.l.b16 %v550
      %v559 = vunpack.c.h.b16 %v550
      %v560 = vunpack.c.l.b16 %v551
      %v561 = vunpack.c.h.b16 %v551
      %v562 = vunpack.c.l.b16 %v552
      %v563 = vunpack.c.h.b16 %v552
      %v564 = vunpack.c.l.b16 %v553
      %v565 = vunpack.c.h.b16 %v553
      %v566 = vpack.c.b16 %v560, %v558
      %v567 = vpack.c.b16 %v561, %v559
      %v568 = vpack.c.b16 %v564, %v562
      %v569 = vpack.c.b16 %v565, %v563
      %vm572 = vcmask 130048
      %v574 = vsel %vm572, %v567, 0
      %v577 = vsel %vm572, %v569, 0
      %579 = vmatprep.subr.bf16.mxu0 %v547
      %580 = vmatpush1.bf16.msra.mxu0 %v546
      %581 = vmatprep.subr.bf16.mxu0 %v495
      %582 = vmatpush1.bf16.msra.mxu0 %v494
      %583 = vmatprep.subr.bf16.mxu0 %v468
      %584 = vmatpush1.bf16.msra.mxu0 %v467
      %585 = vmatprep.subr.bf16.mxu0 %v371
      %586 = vmatpush1.bf16.msra.mxu0 %v370
      %587 = vmatprep.subr.bf16.mxu0 %v437
      %588 = vmatpush1.bf16.msra.mxu0 %v436
      %589 = vmatprep.subr.bf16.mxu0 %v410
      %590 = vmatpush1.bf16.msra.mxu0 %v409
      %591 = vmatprep.subr.bf16.mxu0 %v535
      %592 = vmatpush1.bf16.msra.mxu0 %v534
      %593 = vmatprep.subr.bf16.mxu0 %v368
      %594 = vmatpush1.bf16.msra.mxu0 %v367
      %595 = vmatprep.subr.bf16.mxu0 0
      %596 = vmatpush2.bf16.msra.mxu0 0
      %597 = vmatprep.subr.bf16.mxu0 0
      %598 = vmatpush2.bf16.msra.mxu0 0
      %599 = vmatprep.subr.bf16.mxu0 0
      %600 = vmatpush2.bf16.msra.mxu0 0
      %601 = vmatprep.subr.bf16.mxu0 0
      %602 = vmatpush2.bf16.msra.mxu0 0
      %603 = vmatprep.subr.bf16.mxu0 0
      %604 = vmatpush2.bf16.msra.mxu0 0
      %605 = vmatprep.subr.bf16.mxu0 0
      %606 = vmatpush2.bf16.msra.mxu0 0
      %607 = vmatprep.subr.bf16.mxu0 0
      %608 = vmatpush2.bf16.msra.mxu0 0
      %609 = vmatprep.subr.bf16.mxu0 %v523
      %610 = vmatpush2.bf16.msra.mxu0 %v522
      %611 = vmatprep.mubr.bf16.mxu0 %v574
      %612 = vmatmul.mubr.bf16.gmra.mxu0 %v566
      %v613 = vpop.f32.mrf.mxu0
      %v614 = vadd.f32 0.0, %v613
      %v615 = vpop.f32.mrf.mxu0
      %v616 = vadd.f32 0.0, %v615
      %v617 = vpop.f32.mrf.mxu0
      %v618 = vadd.f32 0.0, %v617
      %v619 = vpop.f32.mrf.mxu0
      %v620 = vadd.f32 0.0, %v619
      %621 = vmatprep.mubr.bf16.mxu0 %v577
      %622 = vmatmul.mubr.bf16.gmra.mxu0 %v568
      %v623 = vpop.f32.mrf.mxu0
      %v624 = vadd.f32 0.0, %v623
      %v625 = vpop.f32.mrf.mxu0
      %v626 = vadd.f32 0.0, %v625
      %v627 = vpop.f32.mrf.mxu0
      %v628 = vadd.f32 0.0, %v627
      %v629 = vpop.f32.mrf.mxu0
      %v630 = vadd.f32 0.0, %v629
      %631 = vdwg.mxu0
      %632 = vst [vmem:[%s232] sm:$0xff] %v614
      %633 = vst [vmem:[%s232 + $0x8] sm:$0xff] %v616
      %634 = vst [vmem:[%s232 + $0x10] sm:$0xff] %v618
      %635 = vst [vmem:[%s232 + $0x18] sm:$0xff] %v620
      %636 = vst [vmem:[%s232 + $0x20] sm:$0xff] %v624
      %637 = vst [vmem:[%s232 + $0x28] sm:$0xff] %v626
      %638 = vst [vmem:[%s232 + $0x30] sm:$0xff] %v628
      %639 = vst [vmem:[%s232 + $0x38] sm:$0xff] %v630
      %v640 = vadd.f32 %v614, %v616
      %641 = vadd.xlane.f32.xlu0 %v640
      %v642 = vpop.xlane.xlu0 %641
      %v643 = vadd.f32 %v618, %v620
      %644 = vadd.xlane.f32.xlu0 %v643
      %v645 = vpop.xlane.xlu0 %644
      %v646 = vadd.f32 %v624, %v626
      %647 = vadd.xlane.f32.xlu0 %v646
      %v648 = vpop.xlane.xlu0 %647
      %v649 = vadd.f32 %v628, %v630
      %650 = vadd.xlane.f32.xlu0 %v649
      %v651 = vpop.xlane.xlu0 %650
      %652 = vst.msk [vmem:[%s237] sm:$0xff] %vm423, %v642
      %653 = vst.msk [vmem:[%s237 + $0x8] sm:$0xff] %vm423, %v645
      %654 = vst.msk [vmem:[%s237 + $0x10] sm:$0xff] %vm423, %v648
      %655 = vst.msk [vmem:[%s237 + $0x18] sm:$0xff] %vm423, %v651
      %v656 = vmul.f32 %v614, %v614
      %v657 = vmul.f32 %v616, %v616
      %v658 = vmul.f32 %v618, %v618
      %v659 = vmul.f32 %v620, %v620
      %v660 = vmul.f32 %v624, %v624
      %v661 = vmul.f32 %v626, %v626
      %v662 = vmul.f32 %v628, %v628
      %v663 = vmul.f32 %v630, %v630
      %v664 = vadd.f32 %v656, %v657
      %665 = vadd.xlane.f32.xlu0 %v664
      %v666 = vpop.xlane.xlu0 %665
      %v667 = vadd.f32 %v658, %v659
      %668 = vadd.xlane.f32.xlu0 %v667
      %v669 = vpop.xlane.xlu0 %668
      %v670 = vadd.f32 %v660, %v661
      %671 = vadd.xlane.f32.xlu0 %v670
      %v672 = vpop.xlane.xlu0 %671
      %v673 = vadd.f32 %v662, %v663
      %674 = vadd.xlane.f32.xlu0 %v673
      %v675 = vpop.xlane.xlu0 %674
      %676 = vst.msk [vmem:[%s237 + $0x20] sm:$0xff] %vm423, %v666
      %677 = vst.msk [vmem:[%s237 + $0x28] sm:$0xff] %vm423, %v669
      %678 = vst.msk [vmem:[%s237 + $0x30] sm:$0xff] %vm423, %v672
      %679 = vst.msk [vmem:[%s237 + $0x38] sm:$0xff] %vm423, %v675
      %p680 = scmp.lt.s32.totalorder %s17, 1
      %s681 = scalar_select %p680, %s17, 1
      %s682 = smul.addr %s681, 8
      %s683 = smul.addr %s682, 8
      %s684 = scalar_lea.vmem %s4, %s683
      %p685 = scmp.lt.s32.totalorder %s17, 1
      %s686 = scalar_select %p685, %s17, 1
      %s687 = smul.addr %s686, 8
      %s688 = smul.addr %s687, 8
      %s689 = scalar_lea.vmem %s5, %s688
      // Predicated region
      $region37: #{decoder_block_forward.5} parent=35 // pred_check
        %p690 = pneg %p124
      $region38: #{decoder_block_forward.5} parent=35 // pred_check_branch
        %692 = sbr.rel (%p690) target = $region40
      $region39: #{decoder_block_forward.5} parent=35 // pred_region
        _
      $region40: #{decoder_block_forward.5} parent=35 // pred_fallthru
        _
      // Predicated region
      $region41: #{decoder_block_forward.5} parent=35 // pred_check
        %p693 = pneg %p150
      $region42: #{decoder_block_forward.5} parent=35 // pred_check_branch
        %695 = sbr.rel (%p693) target = $region44
      $region43: #{decoder_block_forward.5} parent=35 // pred_region
        _
      $region44: #{decoder_block_forward.5} parent=35 // pred_fallthru
        _
    $region36: #{decoder_block_forward.5} parent=5 // pred_fallthru
      _
    %p696 = scmp.le.s32.totalorder 2, %s12
    // Predicated region
    $region45: #{decoder_block_forward.5} parent=5 // pred_check
      %p697 = pneg %p696
    $region46: #{decoder_block_forward.5} parent=5 // pred_check_branch
      %699 = sbr.rel (%p697) target = $region48
    $region47: #{decoder_block_forward.5} parent=5 // pred_region
      %s700 = ssub.s32 %s12, 2
      // Predicated region
      $region49: #{decoder_block_forward.5} parent=47 // pred_check
        %p701 = pneg %p130
      $region50: #{decoder_block_forward.5} parent=47 // pred_check_branch
        %703 = sbr.rel (%p701) target = $region52
      $region51: #{decoder_block_forward.5} parent=47 // pred_region
        %p704 = scmp.lt.s32.totalorder %s18, 1
        %s705 = scalar_select %p704, %s18, 1
        %s706 = smul.addr %s705, 8
        %s707 = smul.addr %s706, 8
        %s708 = scalar_lea.vmem %s4, %s707
      $region52: #{decoder_block_forward.5} parent=47 // pred_fallthru
        _
      // Predicated region
      $region53: #{decoder_block_forward.5} parent=47 // pred_check
        %p709 = pneg %p156
      $region54: #{decoder_block_forward.5} parent=47 // pred_check_branch
        %711 = sbr.rel (%p709) target = $region56
      $region55: #{decoder_block_forward.5} parent=47 // pred_region
        %p712 = scmp.lt.s32.totalorder %s18, 1
        %s713 = scalar_select %p712, %s18, 1
        %s714 = smul.addr %s713, 8
        %s715 = smul.addr %s714, 8
        %s716 = scalar_lea.vmem %s5, %s715
      $region56: #{decoder_block_forward.5} parent=47 // pred_fallthru
        _
    $region48: #{decoder_block_forward.5} parent=5 // pred_fallthru
      _
  $region6: #{decoder_block_forward.5} parent=0 // loop_footer
    %s16 = sadd.s32 1, %s12
  $region7: #{decoder_block_forward.5} parent=0 // loop_footer_branch
    %11 = sbr.rel target = $region3
  $region8: #{decoder_block_forward.5} parent=0 // loop_exit
    _

</llo_original>
